<compile_context>
chip_gen: v5e
topology: v5e:2x2
jax: 0.10.0
libtpu: 0.0.40
codegen_flags: <defaults>
</compile_context>

<pallas_src>
import jax
import jax.numpy as jnp
from jax.experimental import pallas as pl
from jax.experimental.pallas import tpu as pltpu

NEG_INF = -1000000000.0   # same value the PyTorch module uses in masked_fill


# ---------------------------------------------------------------------------
# kernel
# ---------------------------------------------------------------------------
def _make_kernel(heads, head_dim, lk_orig, need_weights):
    inv_lk = 1.0 / lk_orig

    def kernel(q_ref, k_ref, v_ref, qkeep_ref, bias_ref,
               wq_ref, bq_ref, wk_ref, bk_ref, wv_ref, bv_ref,
               wo_ref, bo_ref, *rest):
        if need_weights:
            out_ref, attw_ref, kh_ref, vh_ref = rest
        else:
            out_ref, kh_ref, vh_ref = rest
            attw_ref = None
        H, D = heads, head_dim

        # -- once per batch element: full-width K/V projections into per-head
        #    VMEM scratch (persists across the q-tile axis of the grid).
        @pl.when(pl.program_id(1) == 0)
        def _():
            kp = jnp.dot(k_ref[0], wk_ref[...],
                         preferred_element_type=jnp.float32) + bk_ref[...]
            vp = jnp.dot(v_ref[0], wv_ref[...],
                         preferred_element_type=jnp.float32) + bv_ref[...]
            # zero projected V on padded key rows so uniform (query-padded)
            # rows average only over the real keys
            row = jax.lax.broadcasted_iota(jnp.int32, (vp.shape[0], 1), 0)
            vp = jnp.where(row < lk_orig, vp, 0.0)
            kp = kp.astype(jnp.bfloat16)
            vp = vp.astype(jnp.bfloat16)
            for h in range(H):
                kh_ref[h] = kp[:, h * D:(h + 1) * D]
                vh_ref[h] = vp[:, h * D:(h + 1) * D]

        # -- per q tile --------------------------------------------------
        # Q projection: one (TQ,E)@(E,E) matmul; 1/sqrt(D) is pre-folded into
        # wq/bq by the wrapper.  Then split heads with static lane slices.
        qp = (jnp.dot(q_ref[0], wq_ref[...],
                      preferred_element_type=jnp.float32) + bq_ref[...]
              ).astype(jnp.bfloat16)                                   # (TQ, E)
        qh = jnp.stack([qp[:, h * D:(h + 1) * D] for h in range(H)], axis=0)

        kh = kh_ref[...]                                               # (H, Lkp, D)
        vh = vh_ref[...]

        # heads-batched scores (bf16 in, f32 accumulate) + additive mask bias
        scores = jnp.einsum('hqd,hkd->hqk', qh, kh,
                            preferred_element_type=jnp.float32)
        scores = scores + bias_ref[0]          # (TQ,Lkp) or (1,Lkp), broadcasts

        # softmax over keys in f32 (exact divide for parity with PyTorch)
        m = jnp.max(scores, axis=-1, keepdims=True)
        e = jnp.exp(scores - m)
        s = jnp.sum(e, axis=-1, keepdims=True)
        w = e / s

        # PyTorch query-padding semantics: a fully -1e9 row softmaxes to uniform
        w = jnp.where(qkeep_ref[0] > 0.0, w, inv_lk)

        if attw_ref is not None:
            attw_ref[0] = w.astype(attw_ref.dtype)

        # attention-weighted values, then fused output projection:
        # concat_h(ctx_h) @ Wo as a single full-E matmul.
        ctx = jnp.einsum('hqk,hkd->hqd', w.astype(jnp.bfloat16), vh,
                         preferred_element_type=jnp.float32).astype(jnp.bfloat16)
        ctx_flat = jnp.concatenate([ctx[h] for h in range(H)], axis=-1)  # (TQ,E)
        out = jnp.dot(ctx_flat, wo_ref[...],
                      preferred_element_type=jnp.float32) + bo_ref[...]
        out_ref[0] = out

    return kernel


# ---------------------------------------------------------------------------
# wrapper
# ---------------------------------------------------------------------------
def _round_up(x, m):
    return ((x + m - 1) // m) * m


def _pad_axis(x, axis, new_size, value=0.0):
    pad = new_size - x.shape[axis]
    if pad == 0:
        return x
    widths = [(0, 0)] * x.ndim
    widths[axis] = (0, pad)
    return jnp.pad(x, widths, constant_values=value)


def _nbytes(shape, dtype):
    n = 1
    for d in shape:
        n *= int(d)
    return n * jnp.dtype(dtype).itemsize


def multihead_attention(query, key, value, params, heads,
                        query_pad_mask=None, key_pad_mask=None, att_mask=None,
                        need_weights=True, q_tile=None,
                        attw_dtype=jnp.bfloat16):
    """params = (wq, bq, wk, bk, wv, bv, wo, bo); weights (E_in, E_out), biases (1, E)."""
    B, Lq, E = query.shape
    _, Lk, _ = key.shape
    if E % heads != 0:
        raise ValueError(f'embedding_size ({E}) must be divisible by heads ({heads})')
    D = E // heads
    scale = 1.0 / (D ** 0.5)
    wq, bq, wk, bk, wv, bv, wo, bo = params

    # ---- q tiling: 128-row target tiles; pad Lq/Lk instead of giant blocks
    if q_tile is None:
        TQ = min(128, _round_up(Lq, 8))
    else:
        TQ = _round_up(int(q_tile), 8)
    Lqp = _round_up(Lq, TQ)
    Lkp = _round_up(Lk, 128)        # lane-dense scores / attention-weights
    nq = Lqp // TQ

    # ---- parameter layout (one-time): bf16 MXU operands, scale folded into Q
    wq_s = (wq * scale).astype(jnp.bfloat16)
    bq_s = (bq * scale).astype(jnp.float32).reshape(1, E)
    wk16 = wk.astype(jnp.bfloat16)
    wv16 = wv.astype(jnp.bfloat16)
    wo16 = wo.astype(jnp.bfloat16)
    bk_f = bk.astype(jnp.float32).reshape(1, E)
    bv_f = bv.astype(jnp.float32).reshape(1, E)
    bo_f = bo.astype(jnp.float32).reshape(1, E)

    # ---- activations: bf16, padded to tile boundaries (pad rows/keys are inert)
    q16 = _pad_axis(query.astype(jnp.bfloat16), 1, Lqp)
    k16 = _pad_axis(key.astype(jnp.bfloat16), 1, Lkp)
    v16 = _pad_axis(value.astype(jnp.bfloat16), 1, Lkp)

    # ---- compact query keep-flags (PyTorch uniform-row semantics handled in-kernel)
    if query_pad_mask is not None:
        qkeep = (query_pad_mask.reshape(B, Lq, 1) != 0).astype(jnp.float32)
    else:
        qkeep = jnp.ones((B, Lq, 1), jnp.float32)
    qkeep = _pad_axis(qkeep, 1, Lqp, value=1.0)

    # ---- additive score bias: compact (B,1,Lkp) unless a dense att_mask is given
    if att_mask is not None:
        bias = jnp.where(att_mask.reshape(B, Lq, Lk) != 0, 0.0, NEG_INF)
        if key_pad_mask is not None:
            bias = bias + jnp.where(key_pad_mask.reshape(B, 1, Lk) != 0, 0.0, NEG_INF)
        bias = _pad_axis(bias, 1, Lqp, value=0.0)
        bias = _pad_axis(bias, 2, Lkp, value=NEG_INF).astype(jnp.bfloat16)
        bias_block = (1, TQ, Lkp)
        bias_spec = pl.BlockSpec(bias_block, lambda b, qi: (b, qi, 0))
    else:
        if key_pad_mask is not None:
            bias = jnp.where(key_pad_mask.reshape(B, 1, Lk) != 0, 0.0, NEG_INF)
        else:
            bias = jnp.zeros((B, 1, Lk), jnp.float32)
        bias = _pad_axis(bias, 2, Lkp, value=NEG_INF).astype(jnp.bfloat16)
        bias_block = (1, 1, Lkp)
        bias_spec = pl.BlockSpec(bias_block, lambda b, qi: (b, 0, 0))

    def const(shape):    # grid-invariant blocks (weights / biases), no re-DMA
        return pl.BlockSpec(shape, lambda b, qi: (0,) * len(shape))

    in_specs = [
        pl.BlockSpec((1, TQ, E), lambda b, qi: (b, qi, 0)),     # q tile
        pl.BlockSpec((1, Lkp, E), lambda b, qi: (b, 0, 0)),     # k (per batch)
        pl.BlockSpec((1, Lkp, E), lambda b, qi: (b, 0, 0)),     # v (per batch)
        pl.BlockSpec((1, TQ, 1), lambda b, qi: (b, qi, 0)),     # query keep flags
        bias_spec,                                              # additive mask bias
        const((E, E)), const((1, E)),                           # wq, bq (scaled)
        const((E, E)), const((1, E)),                           # wk, bk
        const((E, E)), const((1, E)),                           # wv, bv
        const((E, E)), const((1, E)),                           # wo, bo
    ]

    out_shapes = [jax.ShapeDtypeStruct((B, Lqp, E), jnp.float32)]
    out_specs = [pl.BlockSpec((1, TQ, E), lambda b, qi: (b, qi, 0))]
    if need_weights:
        out_shapes.append(jax.ShapeDtypeStruct((B, heads, Lqp, Lkp), attw_dtype))
        out_specs.append(pl.BlockSpec((1, heads, TQ, Lkp),
                                      lambda b, qi: (b, 0, qi, 0)))

    scratch_shapes = [pltpu.VMEM((heads, Lkp, D), jnp.bfloat16),   # projected K
                      pltpu.VMEM((heads, Lkp, D), jnp.bfloat16)]   # projected V

    # VMEM budget derived from actual block sizes (double-buffered) + scratch.
    block_bytes = (_nbytes((1, TQ, E), jnp.bfloat16)
                   + 2 * _nbytes((1, Lkp, E), jnp.bfloat16)
                   + _nbytes((1, TQ, 1), jnp.float32)
                   + _nbytes(bias_block, jnp.bfloat16)
                   + 4 * _nbytes((E, E), jnp.bfloat16)
                   + 4 * _nbytes((1, E), jnp.float32)
                   + _nbytes((1, TQ, E), jnp.float32))
    if need_weights:
        block_bytes += _nbytes((1, heads, TQ, Lkp), attw_dtype)
    scratch_bytes = 2 * _nbytes((heads, Lkp, D), jnp.bfloat16)
    vmem_limit = max(32 * 1024 * 1024,
                     min(100 * 1024 * 1024,
                         2 * block_bytes + scratch_bytes + 16 * 1024 * 1024))

    kernel = _make_kernel(heads, D, Lk, need_weights)

    outs = pl.pallas_call(
        kernel,
        out_shape=tuple(out_shapes),
        grid_spec=pltpu.PrefetchScalarGridSpec(
            num_scalar_prefetch=0,
            grid=(B, nq),
            in_specs=in_specs,
            out_specs=tuple(out_specs),
            scratch_shapes=scratch_shapes),
        compiler_params=pltpu.CompilerParams(
            # batch may be sharded across cores; qi must stay sequential so the
            # per-batch K/V scratch caching at qi == 0 is valid.
            dimension_semantics=("parallel", "arbitrary"),
            vmem_limit_bytes=int(vmem_limit)),
    )(q16, k16, v16, qkeep, bias,
      wq_s, bq_s, wk16, bk_f, wv16, bv_f, wo16, bo_f)

    out = outs[0][:, :Lq, :]
    if need_weights:
        attw = outs[1][:, :, :Lq, :Lk]
        return out, attw
    return out, None


# ---------------------------------------------------------------------------
# plain-JAX (f32) reference of the PyTorch forward (eval mode)
# ---------------------------------------------------------------------------
def _reference(query, key, value, params, heads,
               query_pad_mask=None, key_pad_mask=None, att_mask=None):
    wq, bq, wk, bk, wv, bv, wo, bo = params
    B, Lq, E = query.shape
    Lk = key.shape[1]
    D = E // heads
    Q = (query @ wq + bq).reshape(B, Lq, heads, D).transpose(0, 2, 1, 3)
    K = (key @ wk + bk).reshape(B, Lk, heads, D).transpose(0, 2, 1, 3)
    V = (value @ wv + bv).reshape(B, Lk, heads, D).transpose(0, 2, 1, 3)
    scores = jnp.einsum('bhqd,bhkd->bhqk', Q, K) / (D ** 0.5)
    if query_pad_mask is not None:
        scores = jnp.where(query_pad_mask.reshape(B, 1, Lq, 1) != 0, scores, NEG_INF)
    if key_pad_mask is not None:
        scores = jnp.where(key_pad_mask.reshape(B, 1, 1, Lk) != 0, scores, NEG_INF)
    if att_mask is not None:
        scores = jnp.where(att_mask != 0, scores, NEG_INF)
    w = jax.nn.softmax(scores, axis=-1)
    attn = jnp.einsum('bhqk,bhkd->bhqd', w, V)
    attn = attn.transpose(0, 2, 1, 3).reshape(B, Lq, E)
    out = attn @ wo + bo
    return out, w


if __name__ == "__main__":
    B, heads, E, Lq, Lk = 2, 4, 32, 32, 24
    head_dim = E // heads

    root = jax.random.PRNGKey(0)
    ks = jax.random.split(root, 12)

    def linear_init(kw, kb, fan_in, fan_out):
        bound = 1.0 / (fan_in ** 0.5)
        W = jax.random.uniform(kw, (fan_in, fan_out), jnp.float32, -bound, bound)
        b = jax.random.uniform(kb, (1, fan_out), jnp.float32, -bound, bound)
        return W, b

    wq, bq = linear_init(ks[0], ks[1], E, E)
    wk, bk = linear_init(ks[2], ks[3], E, E)
    wv, bv = linear_init(ks[4], ks[5], E, E)
    wo, bo = linear_init(ks[6], ks[7], E, E)
    params = (wq, bq, wk, bk, wv, bv, wo, bo)

    query = jax.random.normal(ks[8], (B, Lq, E), jnp.float32)
    key = jax.random.normal(ks[9], (B, Lk, E), jnp.float32)
    value = jax.random.normal(ks[10], (B, Lk, E), jnp.float32)

    # Rectangular causal attention mask, key padding (last 2 keys of batch 1),
    # query padding (last 3 queries of batch 0 -> exercises uniform rows).
    att_mask = jnp.broadcast_to(jnp.tril(jnp.ones((Lq, Lk), jnp.float32)),
                                (B, 1, Lq, Lk))
    key_pad_mask = jnp.ones((B, 1, Lk), jnp.float32).at[1, 0, -2:].set(0.0)
    query_pad_mask = jnp.ones((B, 1, Lq), jnp.float32).at[0, 0, -3:].set(0.0)

    out, attw = multihead_attention(query, key, value, params, heads,
                                    query_pad_mask=query_pad_mask,
                                    key_pad_mask=key_pad_mask,
                                    att_mask=att_mask,
                                    need_weights=True,
                                    q_tile=16)   # 2 q-tiles per batch element
    out_nw, _ = multihead_attention(query, key, value, params, heads,
                                    query_pad_mask=query_pad_mask,
                                    key_pad_mask=key_pad_mask,
                                    att_mask=att_mask,
                                    need_weights=False,
                                    q_tile=16)
    jax.block_until_ready((out, attw, out_nw))

    out_ref, attw_ref = _reference(query, key, value, params, heads,
                                   query_pad_mask=query_pad_mask,
                                   key_pad_mask=key_pad_mask,
                                   att_mask=att_mask)
    assert out.shape == (B, Lq, E)
    assert attw.shape == (B, heads, Lq, Lk)
    # bf16 MXU operands / bf16 attention-weight storage -> loosened tolerances.
    assert jnp.allclose(out, out_ref, atol=2e-2, rtol=2e-2), \
        float(jnp.max(jnp.abs(out - out_ref)))
    assert jnp.allclose(attw.astype(jnp.float32), attw_ref, atol=2e-2, rtol=2e-2), \
        float(jnp.max(jnp.abs(attw.astype(jnp.float32) - attw_ref)))
    assert jnp.allclose(out_nw, out_ref, atol=2e-2, rtol=2e-2), \
        float(jnp.max(jnp.abs(out_nw - out_ref)))

    print("KERNEL_OK")
</pallas_src>

<mosaic_0001>
module attributes {stable_mosaic.version = 11 : i64} {
  func.func @kernel(%arg0: i32, %arg1: i32, %arg2: memref<1x16x32xbf16, #tpu.memory_space<vmem>>, %arg3: memref<1x128x32xbf16, #tpu.memory_space<vmem>>, %arg4: memref<1x128x32xbf16, #tpu.memory_space<vmem>>, %arg5: memref<1x16x1xf32, #tpu.memory_space<vmem>>, %arg6: memref<1x16x128xbf16, #tpu.memory_space<vmem>>, %arg7: memref<32x32xbf16, #tpu.memory_space<vmem>>, %arg8: memref<1x32xf32, #tpu.memory_space<vmem>>, %arg9: memref<32x32xbf16, #tpu.memory_space<vmem>>, %arg10: memref<1x32xf32, #tpu.memory_space<vmem>>, %arg11: memref<32x32xbf16, #tpu.memory_space<vmem>>, %arg12: memref<1x32xf32, #tpu.memory_space<vmem>>, %arg13: memref<32x32xbf16, #tpu.memory_space<vmem>>, %arg14: memref<1x32xf32, #tpu.memory_space<vmem>>, %arg15: memref<1x16x32xf32, #tpu.memory_space<vmem>>, %arg16: memref<1x4x16x128xbf16, #tpu.memory_space<vmem>>, %arg17: memref<4x128x8xbf16, #tpu.memory_space<vmem>>, %arg18: memref<4x128x8xbf16, #tpu.memory_space<vmem>>) attributes {dimension_semantics = [#tpu.dimension_semantics<parallel>, #tpu.dimension_semantics<arbitrary>], iteration_bounds = array<i64: 2, 2>, scalar_prefetch = 0 : i64, scratch_operands = 2 : i64, tpu.core_type = #tpu.core_type<tc>, window_params = [{transform_indices = @transform_0, window_bounds = array<i64: 1, 16, 32>}, {transform_indices = @transform_1, window_bounds = array<i64: 1, 128, 32>}, {transform_indices = @transform_2, window_bounds = array<i64: 1, 128, 32>}, {transform_indices = @transform_3, window_bounds = array<i64: 1, 16, 1>}, {transform_indices = @transform_4, window_bounds = array<i64: 1, 16, 128>}, {pipeline_mode = #tpu.pipeline_mode<synchronous>, transform_indices = @transform_5, window_bounds = array<i64: 32, 32>}, {pipeline_mode = #tpu.pipeline_mode<synchronous>, transform_indices = @transform_6, window_bounds = array<i64: 1, 32>}, {pipeline_mode = #tpu.pipeline_mode<synchronous>, transform_indices = @transform_7, window_bounds = array<i64: 32, 32>}, {pipeline_mode = #tpu.pipeline_mode<synchronous>, transform_indices = @transform_8, window_bounds = array<i64: 1, 32>}, {pipeline_mode = #tpu.pipeline_mode<synchronous>, transform_indices = @transform_9, window_bounds = array<i64: 32, 32>}, {pipeline_mode = #tpu.pipeline_mode<synchronous>, transform_indices = @transform_10, window_bounds = array<i64: 1, 32>}, {pipeline_mode = #tpu.pipeline_mode<synchronous>, transform_indices = @transform_11, window_bounds = array<i64: 32, 32>}, {pipeline_mode = #tpu.pipeline_mode<synchronous>, transform_indices = @transform_12, window_bounds = array<i64: 1, 32>}, {transform_indices = @transform_13, window_bounds = array<i64: 1, 16, 32>}, {transform_indices = @transform_14, window_bounds = array<i64: 1, 4, 16, 128>}]} {
    %c0_i32 = arith.constant 0 : i32
    %0 = arith.cmpi eq, %arg1, %c0_i32 : i32
    %1 = arith.extui %0 : i1 to i32
    %c0_i32_0 = arith.constant 0 : i32
    %2 = arith.cmpi ne, %1, %c0_i32_0 : i32
    scf.if %2 {
      %c0_37 = arith.constant 0 : index
      %c0_38 = arith.constant 0 : index
      %c0_39 = arith.constant 0 : index
      %70 = vector.load %arg3[%c0_37, %c0_38, %c0_39] : memref<1x128x32xbf16, #tpu.memory_space<vmem>>, vector<1x128x32xbf16>
      %71 = vector.shape_cast %70 : vector<1x128x32xbf16> to vector<128x32xbf16>
      %c0_40 = arith.constant 0 : index
      %c0_41 = arith.constant 0 : index
      %72 = vector.load %arg9[%c0_40, %c0_41] : memref<32x32xbf16, #tpu.memory_space<vmem>>, vector<32x32xbf16>
      %cst_42 = arith.constant dense<0.000000e+00> : vector<128x32xf32>
      %73 = tpu.matmul %71, %72, %cst_42 {dimension_numbers = #tpu.dot_dimension_numbers<[1], [0], [0], [1], [0, 0, 1, 1], [], []>} : vector<128x32xbf16>, vector<32x32xbf16>, vector<128x32xf32> -> vector<128x32xf32>
      %c0_43 = arith.constant 0 : index
      %c0_44 = arith.constant 0 : index
      %74 = vector.load %arg10[%c0_43, %c0_44] : memref<1x32xf32, #tpu.memory_space<vmem>>, vector<1x32xf32>
      %75 = vector.broadcast %74 : vector<1x32xf32> to vector<128x32xf32>
      %76 = arith.addf %73, %75 : vector<128x32xf32>
      %c0_45 = arith.constant 0 : index
      %c0_46 = arith.constant 0 : index
      %c0_47 = arith.constant 0 : index
      %77 = vector.load %arg4[%c0_45, %c0_46, %c0_47] : memref<1x128x32xbf16, #tpu.memory_space<vmem>>, vector<1x128x32xbf16>
      %78 = vector.shape_cast %77 : vector<1x128x32xbf16> to vector<128x32xbf16>
      %c0_48 = arith.constant 0 : index
      %c0_49 = arith.constant 0 : index
      %79 = vector.load %arg11[%c0_48, %c0_49] : memref<32x32xbf16, #tpu.memory_space<vmem>>, vector<32x32xbf16>
      %cst_50 = arith.constant dense<0.000000e+00> : vector<128x32xf32>
      %80 = tpu.matmul %78, %79, %cst_50 {dimension_numbers = #tpu.dot_dimension_numbers<[1], [0], [0], [1], [0, 0, 1, 1], [], []>} : vector<128x32xbf16>, vector<32x32xbf16>, vector<128x32xf32> -> vector<128x32xf32>
      %c0_51 = arith.constant 0 : index
      %c0_52 = arith.constant 0 : index
      %81 = vector.load %arg12[%c0_51, %c0_52] : memref<1x32xf32, #tpu.memory_space<vmem>>, vector<1x32xf32>
      %82 = vector.broadcast %81 : vector<1x32xf32> to vector<128x32xf32>
      %83 = arith.addf %80, %82 : vector<128x32xf32>
      %84 = tpu.iota {dimensions = array<i32: 0>} : vector<128x1xi32>
      %c24_i32 = arith.constant 24 : i32
      %85 = vector.broadcast %c24_i32 : i32 to vector<128x1xi32>
      %86 = arith.cmpi slt, %84, %85 : vector<128x1xi32>
      %cst_53 = arith.constant 0.000000e+00 : f32
      %87 = vector.shape_cast %86 : vector<128x1xi1> to vector<128x1xi1>
      %88 = vector.broadcast %87 : vector<128x1xi1> to vector<128x32xi1>
      %89 = vector.broadcast %cst_53 : f32 to vector<128x32xf32>
      %90 = arith.select %88, %83, %89 : vector<128x32xi1>, vector<128x32xf32>
      %91 = arith.truncf %76 : vector<128x32xf32> to vector<128x32xbf16>
      %92 = arith.truncf %90 : vector<128x32xf32> to vector<128x32xbf16>
      %93 = vector.extract_strided_slice %91 {offsets = [0, 0], sizes = [128, 8], strides = [1, 1]} : vector<128x32xbf16> to vector<128x8xbf16>
      %c0_54 = arith.constant 0 : index
      %c0_55 = arith.constant 0 : index
      %c0_56 = arith.constant 0 : index
      %94 = vector.load %arg17[%c0_54, %c0_55, %c0_56] : memref<4x128x8xbf16, #tpu.memory_space<vmem>>, vector<1x128x8xbf16>
      %95 = vector.shape_cast %94 : vector<1x128x8xbf16> to vector<128x8xbf16>
      %96 = vector.shape_cast %93 : vector<128x8xbf16> to vector<1x128x8xbf16>
      tpu.vector_store %arg17[%c0_54, %c0_55, %c0_56], %96 {strides = array<i32>} : memref<4x128x8xbf16, #tpu.memory_space<vmem>>, vector<1x128x8xbf16>,
      %97 = vector.extract_strided_slice %92 {offsets = [0, 0], sizes = [128, 8], strides = [1, 1]} : vector<128x32xbf16> to vector<128x8xbf16>
      %c0_57 = arith.constant 0 : index
      %c0_58 = arith.constant 0 : index
      %c0_59 = arith.constant 0 : index
      %98 = vector.load %arg18[%c0_57, %c0_58, %c0_59] : memref<4x128x8xbf16, #tpu.memory_space<vmem>>, vector<1x128x8xbf16>
      %99 = vector.shape_cast %98 : vector<1x128x8xbf16> to vector<128x8xbf16>
      %100 = vector.shape_cast %97 : vector<128x8xbf16> to vector<1x128x8xbf16>
      tpu.vector_store %arg18[%c0_57, %c0_58, %c0_59], %100 {strides = array<i32>} : memref<4x128x8xbf16, #tpu.memory_space<vmem>>, vector<1x128x8xbf16>,
      %101 = vector.extract_strided_slice %91 {offsets = [0, 8], sizes = [128, 8], strides = [1, 1]} : vector<128x32xbf16> to vector<128x8xbf16>
      %c1 = arith.constant 1 : index
      %c0_60 = arith.constant 0 : index
      %c0_61 = arith.constant 0 : index
      %102 = vector.load %arg17[%c1, %c0_60, %c0_61] : memref<4x128x8xbf16, #tpu.memory_space<vmem>>, vector<1x128x8xbf16>
      %103 = vector.shape_cast %102 : vector<1x128x8xbf16> to vector<128x8xbf16>
      %104 = vector.shape_cast %101 : vector<128x8xbf16> to vector<1x128x8xbf16>
      tpu.vector_store %arg17[%c1, %c0_60, %c0_61], %104 {strides = array<i32>} : memref<4x128x8xbf16, #tpu.memory_space<vmem>>, vector<1x128x8xbf16>,
      %105 = vector.extract_strided_slice %92 {offsets = [0, 8], sizes = [128, 8], strides = [1, 1]} : vector<128x32xbf16> to vector<128x8xbf16>
      %c1_62 = arith.constant 1 : index
      %c0_63 = arith.constant 0 : index
      %c0_64 = arith.constant 0 : index
      %106 = vector.load %arg18[%c1_62, %c0_63, %c0_64] : memref<4x128x8xbf16, #tpu.memory_space<vmem>>, vector<1x128x8xbf16>
      %107 = vector.shape_cast %106 : vector<1x128x8xbf16> to vector<128x8xbf16>
      %108 = vector.shape_cast %105 : vector<128x8xbf16> to vector<1x128x8xbf16>
      tpu.vector_store %arg18[%c1_62, %c0_63, %c0_64], %108 {strides = array<i32>} : memref<4x128x8xbf16, #tpu.memory_space<vmem>>, vector<1x128x8xbf16>,
      %109 = vector.extract_strided_slice %91 {offsets = [0, 16], sizes = [128, 8], strides = [1, 1]} : vector<128x32xbf16> to vector<128x8xbf16>
      %c2 = arith.constant 2 : index
      %c0_65 = arith.constant 0 : index
      %c0_66 = arith.constant 0 : index
      %110 = vector.load %arg17[%c2, %c0_65, %c0_66] : memref<4x128x8xbf16, #tpu.memory_space<vmem>>, vector<1x128x8xbf16>
      %111 = vector.shape_cast %110 : vector<1x128x8xbf16> to vector<128x8xbf16>
      %112 = vector.shape_cast %109 : vector<128x8xbf16> to vector<1x128x8xbf16>
      tpu.vector_store %arg17[%c2, %c0_65, %c0_66], %112 {strides = array<i32>} : memref<4x128x8xbf16, #tpu.memory_space<vmem>>, vector<1x128x8xbf16>,
      %113 = vector.extract_strided_slice %92 {offsets = [0, 16], sizes = [128, 8], strides = [1, 1]} : vector<128x32xbf16> to vector<128x8xbf16>
      %c2_67 = arith.constant 2 : index
      %c0_68 = arith.constant 0 : index
      %c0_69 = arith.constant 0 : index
      %114 = vector.load %arg18[%c2_67, %c0_68, %c0_69] : memref<4x128x8xbf16, #tpu.memory_space<vmem>>, vector<1x128x8xbf16>
      %115 = vector.shape_cast %114 : vector<1x128x8xbf16> to vector<128x8xbf16>
      %116 = vector.shape_cast %113 : vector<128x8xbf16> to vector<1x128x8xbf16>
      tpu.vector_store %arg18[%c2_67, %c0_68, %c0_69], %116 {strides = array<i32>} : memref<4x128x8xbf16, #tpu.memory_space<vmem>>, vector<1x128x8xbf16>,
      %117 = vector.extract_strided_slice %91 {offsets = [0, 24], sizes = [128, 8], strides = [1, 1]} : vector<128x32xbf16> to vector<128x8xbf16>
      %c3 = arith.constant 3 : index
      %c0_70 = arith.constant 0 : index
      %c0_71 = arith.constant 0 : index
      %118 = vector.load %arg17[%c3, %c0_70, %c0_71] : memref<4x128x8xbf16, #tpu.memory_space<vmem>>, vector<1x128x8xbf16>
      %119 = vector.shape_cast %118 : vector<1x128x8xbf16> to vector<128x8xbf16>
      %120 = vector.shape_cast %117 : vector<128x8xbf16> to vector<1x128x8xbf16>
      tpu.vector_store %arg17[%c3, %c0_70, %c0_71], %120 {strides = array<i32>} : memref<4x128x8xbf16, #tpu.memory_space<vmem>>, vector<1x128x8xbf16>,
      %121 = vector.extract_strided_slice %92 {offsets = [0, 24], sizes = [128, 8], strides = [1, 1]} : vector<128x32xbf16> to vector<128x8xbf16>
      %c3_72 = arith.constant 3 : index
      %c0_73 = arith.constant 0 : index
      %c0_74 = arith.constant 0 : index
      %122 = vector.load %arg18[%c3_72, %c0_73, %c0_74] : memref<4x128x8xbf16, #tpu.memory_space<vmem>>, vector<1x128x8xbf16>
      %123 = vector.shape_cast %122 : vector<1x128x8xbf16> to vector<128x8xbf16>
      %124 = vector.shape_cast %121 : vector<128x8xbf16> to vector<1x128x8xbf16>
      tpu.vector_store %arg18[%c3_72, %c0_73, %c0_74], %124 {strides = array<i32>} : memref<4x128x8xbf16, #tpu.memory_space<vmem>>, vector<1x128x8xbf16>,
    } else {
    }
    %c0 = arith.constant 0 : index
    %c0_1 = arith.constant 0 : index
    %c0_2 = arith.constant 0 : index
    %3 = vector.load %arg2[%c0, %c0_1, %c0_2] : memref<1x16x32xbf16, #tpu.memory_space<vmem>>, vector<1x16x32xbf16>
    %4 = vector.shape_cast %3 : vector<1x16x32xbf16> to vector<16x32xbf16>
    %c0_3 = arith.constant 0 : index
    %c0_4 = arith.constant 0 : index
    %5 = vector.load %arg7[%c0_3, %c0_4] : memref<32x32xbf16, #tpu.memory_space<vmem>>, vector<32x32xbf16>
    %cst = arith.constant dense<0.000000e+00> : vector<16x32xf32>
    %6 = tpu.matmul %4, %5, %cst {dimension_numbers = #tpu.dot_dimension_numbers<[1], [0], [0], [1], [0, 0, 1, 1], [], []>} : vector<16x32xbf16>, vector<32x32xbf16>, vector<16x32xf32> -> vector<16x32xf32>
    %c0_5 = arith.constant 0 : index
    %c0_6 = arith.constant 0 : index
    %7 = vector.load %arg8[%c0_5, %c0_6] : memref<1x32xf32, #tpu.memory_space<vmem>>, vector<1x32xf32>
    %8 = vector.broadcast %7 : vector<1x32xf32> to vector<16x32xf32>
    %9 = arith.addf %6, %8 : vector<16x32xf32>
    %10 = arith.truncf %9 : vector<16x32xf32> to vector<16x32xbf16>
    %11 = vector.extract_strided_slice %10 {offsets = [0, 0], sizes = [16, 8], strides = [1, 1]} : vector<16x32xbf16> to vector<16x8xbf16>
    %12 = vector.extract_strided_slice %10 {offsets = [0, 8], sizes = [16, 8], strides = [1, 1]} : vector<16x32xbf16> to vector<16x8xbf16>
    %13 = vector.extract_strided_slice %10 {offsets = [0, 16], sizes = [16, 8], strides = [1, 1]} : vector<16x32xbf16> to vector<16x8xbf16>
    %14 = vector.extract_strided_slice %10 {offsets = [0, 24], sizes = [16, 8], strides = [1, 1]} : vector<16x32xbf16> to vector<16x8xbf16>
    %15 = vector.shape_cast %11 : vector<16x8xbf16> to vector<1x16x8xbf16>
    %16 = vector.shape_cast %12 : vector<16x8xbf16> to vector<1x16x8xbf16>
    %17 = vector.shape_cast %13 : vector<16x8xbf16> to vector<1x16x8xbf16>
    %18 = vector.shape_cast %14 : vector<16x8xbf16> to vector<1x16x8xbf16>
    %19 = tpu.concatenate %15, %16, %17, %18 in 0 : vector<1x16x8xbf16>, vector<1x16x8xbf16>, vector<1x16x8xbf16>, vector<1x16x8xbf16> -> vector<4x16x8xbf16>
    %c0_7 = arith.constant 0 : index
    %c0_8 = arith.constant 0 : index
    %c0_9 = arith.constant 0 : index
    %20 = vector.load %arg17[%c0_7, %c0_8, %c0_9] : memref<4x128x8xbf16, #tpu.memory_space<vmem>>, vector<4x128x8xbf16>
    %c0_10 = arith.constant 0 : index
    %c0_11 = arith.constant 0 : index
    %c0_12 = arith.constant 0 : index
    %21 = vector.load %arg18[%c0_10, %c0_11, %c0_12] : memref<4x128x8xbf16, #tpu.memory_space<vmem>>, vector<4x128x8xbf16>
    "tpu.trace_start"() <{level = 10 : i32, message = "hqd,hkd->hqk"}> : () -> ()
    %cst_13 = arith.constant dense<0.000000e+00> : vector<4x16x128xf32>
    %22 = tpu.matmul %19, %20, %cst_13 {dimension_numbers = #tpu.dot_dimension_numbers<[2], [2], [1], [1], [0, 0, 0, 1, 1, 1], [0], [0]>} : vector<4x16x8xbf16>, vector<4x128x8xbf16>, vector<4x16x128xf32> -> vector<4x16x128xf32>
    "tpu.trace_stop"() : () -> ()
    %c0_14 = arith.constant 0 : index
    %c0_15 = arith.constant 0 : index
    %c0_16 = arith.constant 0 : index
    %23 = vector.load %arg6[%c0_14, %c0_15, %c0_16] : memref<1x16x128xbf16, #tpu.memory_space<vmem>>, vector<1x16x128xbf16>
    %24 = vector.shape_cast %23 : vector<1x16x128xbf16> to vector<16x128xbf16>
    %25 = arith.extf %24 : vector<16x128xbf16> to vector<16x128xf32>
    %26 = vector.shape_cast %25 : vector<16x128xf32> to vector<1x16x128xf32>
    %27 = vector.broadcast %26 : vector<1x16x128xf32> to vector<4x16x128xf32>
    %28 = arith.addf %22, %27 : vector<4x16x128xf32>
    %cst_17 = arith.constant dense<0xFF800000> : vector<4x16xf32>
    %29 = vector.multi_reduction <maximumf>, %28, %cst_17 [2] : vector<4x16x128xf32> to vector<4x16xf32>
    %30 = vector.shape_cast %29 : vector<4x16xf32> to vector<4x16x1xf32>
    %31 = vector.broadcast %30 : vector<4x16x1xf32> to vector<4x16x128xf32>
    %32 = arith.subf %28, %31 : vector<4x16x128xf32>
    %33 = math.exp %32 : vector<4x16x128xf32>
    %cst_18 = arith.constant dense<0.000000e+00> : vector<4x16xf32>
    %34 = vector.multi_reduction <add>, %33, %cst_18 [2] : vector<4x16x128xf32> to vector<4x16xf32>
    %35 = vector.shape_cast %34 : vector<4x16xf32> to vector<4x16x1xf32>
    %36 = vector.broadcast %35 : vector<4x16x1xf32> to vector<4x16x128xf32>
    %37 = arith.divf %33, %36 : vector<4x16x128xf32>
    %c0_19 = arith.constant 0 : index
    %c0_20 = arith.constant 0 : index
    %c0_21 = arith.constant 0 : index
    %38 = vector.load %arg5[%c0_19, %c0_20, %c0_21] : memref<1x16x1xf32, #tpu.memory_space<vmem>>, vector<1x16x1xf32>
    %39 = vector.shape_cast %38 : vector<1x16x1xf32> to vector<16x1xf32>
    %cst_22 = arith.constant 0.000000e+00 : f32
    %40 = vector.broadcast %cst_22 : f32 to vector<16x1xf32>
    %41 = arith.cmpf ogt, %39, %40 : vector<16x1xf32>
    %cst_23 = arith.constant 0.0416666679 : f32
    %42 = vector.shape_cast %41 : vector<16x1xi1> to vector<1x16x1xi1>
    %43 = vector.broadcast %42 : vector<1x16x1xi1> to vector<4x16x128xi1>
    %44 = vector.broadcast %cst_23 : f32 to vector<4x16x128xf32>
    %45 = arith.select %43, %37, %44 : vector<4x16x128xi1>, vector<4x16x128xf32>
    %46 = arith.truncf %45 : vector<4x16x128xf32> to vector<4x16x128xbf16>
    %c0_24 = arith.constant 0 : index
    %c0_25 = arith.constant 0 : index
    %c0_26 = arith.constant 0 : index
    %c0_27 = arith.constant 0 : index
    %47 = vector.load %arg16[%c0_24, %c0_25, %c0_26, %c0_27] : memref<1x4x16x128xbf16, #tpu.memory_space<vmem>>, vector<1x4x16x128xbf16>
    %48 = vector.shape_cast %47 : vector<1x4x16x128xbf16> to vector<4x16x128xbf16>
    %49 = vector.shape_cast %46 : vector<4x16x128xbf16> to vector<1x4x16x128xbf16>
    tpu.vector_store %arg16[%c0_24, %c0_25, %c0_26, %c0_27], %49 {strides = array<i32>} : memref<1x4x16x128xbf16, #tpu.memory_space<vmem>>, vector<1x4x16x128xbf16>,
    %50 = arith.truncf %45 : vector<4x16x128xf32> to vector<4x16x128xbf16>
    "tpu.trace_start"() <{level = 10 : i32, message = "hqk,hkd->hqd"}> : () -> ()
    %cst_28 = arith.constant dense<0.000000e+00> : vector<4x16x8xf32>
    %51 = tpu.matmul %50, %21, %cst_28 {dimension_numbers = #tpu.dot_dimension_numbers<[2], [1], [1], [2], [0, 0, 0, 1, 1, 2], [0], [0]>} : vector<4x16x128xbf16>, vector<4x128x8xbf16>, vector<4x16x8xf32> -> vector<4x16x8xf32>
    "tpu.trace_stop"() : () -> ()
    %52 = arith.truncf %51 : vector<4x16x8xf32> to vector<4x16x8xbf16>
    %53 = vector.extract_strided_slice %52 {offsets = [0, 0, 0], sizes = [1, 16, 8], strides = [1, 1, 1]} : vector<4x16x8xbf16> to vector<1x16x8xbf16>
    %54 = vector.shape_cast %53 : vector<1x16x8xbf16> to vector<16x8xbf16>
    %55 = vector.extract_strided_slice %52 {offsets = [1, 0, 0], sizes = [1, 16, 8], strides = [1, 1, 1]} : vector<4x16x8xbf16> to vector<1x16x8xbf16>
    %56 = vector.shape_cast %55 : vector<1x16x8xbf16> to vector<16x8xbf16>
    %57 = vector.extract_strided_slice %52 {offsets = [2, 0, 0], sizes = [1, 16, 8], strides = [1, 1, 1]} : vector<4x16x8xbf16> to vector<1x16x8xbf16>
    %58 = vector.shape_cast %57 : vector<1x16x8xbf16> to vector<16x8xbf16>
    %59 = vector.extract_strided_slice %52 {offsets = [3, 0, 0], sizes = [1, 16, 8], strides = [1, 1, 1]} : vector<4x16x8xbf16> to vector<1x16x8xbf16>
    %60 = vector.shape_cast %59 : vector<1x16x8xbf16> to vector<16x8xbf16>
    %61 = tpu.concatenate %54, %56, %58, %60 in 1 : vector<16x8xbf16>, vector<16x8xbf16>, vector<16x8xbf16>, vector<16x8xbf16> -> vector<16x32xbf16>
    %c0_29 = arith.constant 0 : index
    %c0_30 = arith.constant 0 : index
    %62 = vector.load %arg13[%c0_29, %c0_30] : memref<32x32xbf16, #tpu.memory_space<vmem>>, vector<32x32xbf16>
    %cst_31 = arith.constant dense<0.000000e+00> : vector<16x32xf32>
    %63 = tpu.matmul %61, %62, %cst_31 {dimension_numbers = #tpu.dot_dimension_numbers<[1], [0], [0], [1], [0, 0, 1, 1], [], []>} : vector<16x32xbf16>, vector<32x32xbf16>, vector<16x32xf32> -> vector<16x32xf32>
    %c0_32 = arith.constant 0 : index
    %c0_33 = arith.constant 0 : index
    %64 = vector.load %arg14[%c0_32, %c0_33] : memref<1x32xf32, #tpu.memory_space<vmem>>, vector<1x32xf32>
    %65 = vector.broadcast %64 : vector<1x32xf32> to vector<16x32xf32>
    %66 = arith.addf %63, %65 : vector<16x32xf32>
    %c0_34 = arith.constant 0 : index
    %c0_35 = arith.constant 0 : index
    %c0_36 = arith.constant 0 : index
    %67 = vector.load %arg15[%c0_34, %c0_35, %c0_36] : memref<1x16x32xf32, #tpu.memory_space<vmem>>, vector<1x16x32xf32>
    %68 = vector.shape_cast %67 : vector<1x16x32xf32> to vector<16x32xf32>
    %69 = vector.shape_cast %66 : vector<16x32xf32> to vector<1x16x32xf32>
    tpu.vector_store %arg15[%c0_34, %c0_35, %c0_36], %69 {strides = array<i32>} : memref<1x16x32xf32, #tpu.memory_space<vmem>>, vector<1x16x32xf32>,
    return
  }
  func.func @transform_0(%arg0: i32, %arg1: i32) -> (i32, i32, i32) {
    %c0_i32 = arith.constant 0 : i32
    %c0_i32_0 = arith.constant 0 : i32
    return %arg0, %arg1, %c0_i32 : i32, i32, i32
  }
  func.func @transform_1(%arg0: i32, %arg1: i32) -> (i32, i32, i32) {
    %c0_i32 = arith.constant 0 : i32
    %c0_i32_0 = arith.constant 0 : i32
    %c0_i32_1 = arith.constant 0 : i32
    return %arg0, %c0_i32, %c0_i32_0 : i32, i32, i32
  }
  func.func @transform_2(%arg0: i32, %arg1: i32) -> (i32, i32, i32) {
    %c0_i32 = arith.constant 0 : i32
    %c0_i32_0 = arith.constant 0 : i32
    %c0_i32_1 = arith.constant 0 : i32
    return %arg0, %c0_i32, %c0_i32_0 : i32, i32, i32
  }
  func.func @transform_3(%arg0: i32, %arg1: i32) -> (i32, i32, i32) {
    %c0_i32 = arith.constant 0 : i32
    %c0_i32_0 = arith.constant 0 : i32
    return %arg0, %arg1, %c0_i32 : i32, i32, i32
  }
  func.func @transform_4(%arg0: i32, %arg1: i32) -> (i32, i32, i32) {
    %c0_i32 = arith.constant 0 : i32
    %c0_i32_0 = arith.constant 0 : i32
    return %arg0, %arg1, %c0_i32 : i32, i32, i32
  }
  func.func @transform_5(%arg0: i32, %arg1: i32) -> (i32, i32) {
    %c0_i32 = arith.constant 0 : i32
    %c0_i32_0 = arith.constant 0 : i32
    %c0_i32_1 = arith.constant 0 : i32
    return %c0_i32, %c0_i32_0 : i32, i32
  }
  func.func @transform_6(%arg0: i32, %arg1: i32) -> (i32, i32) {
    %c0_i32 = arith.constant 0 : i32
    %c0_i32_0 = arith.constant 0 : i32
    %c0_i32_1 = arith.constant 0 : i32
    return %c0_i32, %c0_i32_0 : i32, i32
  }
  func.func @transform_7(%arg0: i32, %arg1: i32) -> (i32, i32) {
    %c0_i32 = arith.constant 0 : i32
    %c0_i32_0 = arith.constant 0 : i32
    %c0_i32_1 = arith.constant 0 : i32
    return %c0_i32, %c0_i32_0 : i32, i32
  }
  func.func @transform_8(%arg0: i32, %arg1: i32) -> (i32, i32) {
    %c0_i32 = arith.constant 0 : i32
    %c0_i32_0 = arith.constant 0 : i32
    %c0_i32_1 = arith.constant 0 : i32
    return %c0_i32, %c0_i32_0 : i32, i32
  }
  func.func @transform_9(%arg0: i32, %arg1: i32) -> (i32, i32) {
    %c0_i32 = arith.constant 0 : i32
    %c0_i32_0 = arith.constant 0 : i32
    %c0_i32_1 = arith.constant 0 : i32
    return %c0_i32, %c0_i32_0 : i32, i32
  }
  func.func @transform_10(%arg0: i32, %arg1: i32) -> (i32, i32) {
    %c0_i32 = arith.constant 0 : i32
    %c0_i32_0 = arith.constant 0 : i32
    %c0_i32_1 = arith.constant 0 : i32
    return %c0_i32, %c0_i32_0 : i32, i32
  }
  func.func @transform_11(%arg0: i32, %arg1: i32) -> (i32, i32) {
    %c0_i32 = arith.constant 0 : i32
    %c0_i32_0 = arith.constant 0 : i32
    %c0_i32_1 = arith.constant 0 : i32
    return %c0_i32, %c0_i32_0 : i32, i32
  }
  func.func @transform_12(%arg0: i32, %arg1: i32) -> (i32, i32) {
    %c0_i32 = arith.constant 0 : i32
    %c0_i32_0 = arith.constant 0 : i32
    %c0_i32_1 = arith.constant 0 : i32
    return %c0_i32, %c0_i32_0 : i32, i32
  }
  func.func @transform_13(%arg0: i32, %arg1: i32) -> (i32, i32, i32) {
    %c0_i32 = arith.constant 0 : i32
    %c0_i32_0 = arith.constant 0 : i32
    return %arg0, %arg1, %c0_i32 : i32, i32, i32
  }
  func.func @transform_14(%arg0: i32, %arg1: i32) -> (i32, i32, i32, i32) {
    %c0_i32 = arith.constant 0 : i32
    %c0_i32_0 = arith.constant 0 : i32
    %c0_i32_1 = arith.constant 0 : i32
    return %arg0, %c0_i32, %arg1, %c0_i32_0 : i32, i32, i32, i32
  }
}

</mosaic_0001>

<llo_original>
// kernel: tpu_custom_call.1
$region0: #{tpu_custom_call.1}
  #allocation0 [shape = 'u32[]', space=smem, size = 0x4, offset = 0x4, fixed_abs, tag = 'smem constant byte address 0x4 - core index']
  #allocation1 [shape = 'u32[72,128]{1,0:T(1,128)}', space=vmem, size = 0x9000, scoped, tag = 'internal scratch']
  #allocation2 [shape = 'bf16[4,128,8]{2,1,0:T(8,128)(2,1)}', space=vmem, size = 0x20000, scoped, tag = 'scratch operand']
  #allocation3 [shape = 'bf16[4,128,8]{2,1,0:T(8,128)(2,1)}', space=vmem, size = 0x20000, scoped, tag = 'scratch operand']
  #allocation8 [shape = 's32[]', space=sflag, size = 0x4, offset = 0, fixed_abs, tag = 'sflag constant byte address 0x0 - dummy sync flag']
  %s0 = inlined_call_operand.vmem [shape: bf16[2,32,32], index: 0, kind: input, shape index: {}]
  %s1 = inlined_call_operand.vmem [shape: bf16[2,128,32], index: 1, kind: input, shape index: {}]
  %s2 = inlined_call_operand.vmem [shape: bf16[2,128,32], index: 2, kind: input, shape index: {}]
  %s3 = inlined_call_operand.vmem [shape: f32[2,32,1], index: 3, kind: input, shape index: {}]
  %s4 = inlined_call_operand.vmem [shape: bf16[2,32,128], index: 4, kind: input, shape index: {}]
  %s5 = inlined_call_operand.vmem [shape: bf16[32,32], index: 5, kind: input, shape index: {}]
  %s6 = inlined_call_operand.vmem [shape: f32[1,32], index: 6, kind: input, shape index: {}]
  %s7 = inlined_call_operand.vmem [shape: bf16[32,32], index: 7, kind: input, shape index: {}]
  %s8 = inlined_call_operand.vmem [shape: f32[1,32], index: 8, kind: input, shape index: {}]
  %s9 = inlined_call_operand.vmem [shape: bf16[32,32], index: 9, kind: input, shape index: {}]
  %s10 = inlined_call_operand.vmem [shape: f32[1,32], index: 10, kind: input, shape index: {}]
  %s11 = inlined_call_operand.vmem [shape: bf16[32,32], index: 11, kind: input, shape index: {}]
  %s12 = inlined_call_operand.vmem [shape: f32[1,32], index: 12, kind: input, shape index: {}]
  %s13 = inlined_call_operand.hbm [shape: f32[2,32,32], index: 13, kind: output, shape index: {0}]
  %s14 = inlined_call_operand.hbm [shape: bf16[2,4,32,128], index: 14, kind: output, shape index: {1}]
  %15 = xla_tuple %s13, %s14
  %s16 = sld [smem:[#allocation0]]
  $region97: #{tpu_custom_call.1} parent=0
    _
  %s18 = ssub.s32 1, %s16
  %s19 = scalar_select 0, %s18, %s16
  $region1: #{tpu_custom_call.1} parent=0
    #allocation4 [shape = 'u8[16384]{0}', space=vmem, size = 0x4000, scoped, tag = 'output window, operand 0']
    #allocation5 [shape = 's32[2]{0}', space=sflag, size = 0x8, scoped, tag = 'scoped memory for tpu_custom_call.1']
    #allocation6 [shape = 'u8[32768]{0}', space=vmem, size = 0x8000, scoped, tag = 'output window, operand 1']
    #allocation7 [shape = 's32[2]{0}', space=sflag, size = 0x8, scoped, tag = 'scoped memory for tpu_custom_call.1']
    %20 = vsyncpa [#allocation5], 0
    %s21 = scalar_lea.sflag [#allocation5], 1
    %22 = vsyncpa %s21, 0
    %23 = vsyncpa [#allocation7], 0
    %s24 = scalar_lea.sflag [#allocation7], 1
    %25 = vsyncpa %s24, 0
    loop: start=0, step=1, limit=6
    $region2: #{tpu_custom_call.1} parent=1 // loop_pre_header
      _
    $region3: #{tpu_custom_call.1} parent=1 // loop_header
      %s27 = sphi 0, %s31
      %p28 = scmp.ge.s32.totalorder %s27, 6
      %s34 = sphi 0, %s46
      %s35 = sphi 0, %s42
      %s36 = sphi 0, %s34
      %s37 = sphi 0, %s35
      %s38 = sphi 0, %s36
      %s39 = sphi 0, %s37
      %s51 = sphi 0, %s53
      %s54 = sphi 0, %s51
      %s55 = sphi 0, %s54
      %s71 = sphi 0, %s55
      %s77 = sphi 0, %s79
      %s80 = sphi 0, %s77
      %s81 = sphi 0, %s80
      %s97 = sphi 0, %s81
      %s103 = sphi 0, %s105
      %s106 = sphi 0, %s103
      %s107 = sphi 0, %s106
      %s123 = sphi 0, %s107
      %s131 = sphi 0, %s133
      %s134 = sphi 0, %s131
      %s135 = sphi 0, %s134
      %s151 = sphi 0, %s135
      %s159 = sphi 0, %s161
      %s162 = sphi 0, %s159
      %s163 = sphi 0, %s162
      %s179 = sphi 0, %s163
      %s183 = sphi 0, %s183
      %s185 = sphi 0, %s183
      %s186 = sphi 0, %s185
      %s200 = sphi 0, %s186
      %s204 = sphi 0, %s204
      %s206 = sphi 0, %s204
      %s207 = sphi 0, %s206
      %s221 = sphi 0, %s207
      %s225 = sphi 0, %s225
      %s227 = sphi 0, %s225
      %s228 = sphi 0, %s227
      %s242 = sphi 0, %s228
      %s246 = sphi 0, %s246
      %s248 = sphi 0, %s246
      %s249 = sphi 0, %s248
      %s263 = sphi 0, %s249
      %s267 = sphi 0, %s267
      %s269 = sphi 0, %s267
      %s270 = sphi 0, %s269
      %s284 = sphi 0, %s270
      %s288 = sphi 0, %s288
      %s290 = sphi 0, %s288
      %s291 = sphi 0, %s290
      %s305 = sphi 0, %s291
      %s309 = sphi 0, %s309
      %s311 = sphi 0, %s309
      %s312 = sphi 0, %s311
      %s326 = sphi 0, %s312
      %s330 = sphi 0, %s330
      %s332 = sphi 0, %s330
      %s333 = sphi 0, %s332
      %s347 = sphi 0, %s333
      %s355 = sphi 0, %s357
      %s358 = sphi 0, %s355
      %s359 = sphi 0, %s358
      %s375 = sphi 0, %s359
      %s383 = sphi 0, %s385
      %s386 = sphi 0, %s383
      %s387 = sphi 0, %s386
      %s403 = sphi 0, %s387
    $region4: #{tpu_custom_call.1} parent=1 // loop_header_branch
      %30 = sbr.rel (%p28) target = $region8
    $region5: #{tpu_custom_call.1} parent=1 // loop_body
      %s32 = ssub.s32 %s27, 1
      %s33 = ssub.s32 %s27, 2
      %s40 = sadd.s32 1, %s35
      %p41 = scmp.ge.s32.totalorder %s40, 2
      %s42 = scalar_select %p41, 0, %s40
      %s43 = sadd.s32 1, %s34
      %s44 = scalar_select %p41, %s43, %s34
      %p45 = scmp.ge.s32.totalorder %s44, 2
      %s46 = scalar_select %p45, 0, %s44
      %s47 = ssub.s32 %s34, %s46
      %s48 = ssub.s32 %s35, %s42
      %s49 = sor.u32 %s47, %s48
      %p50 = scmp.eq.s32.totalorder %s49, 0
      %s52 = sadd.s32 %s51, 1
      %s53 = scalar_select %p50, %s51, %s52
      %p56 = pneg %p50
      %p57 = scmp.eq.s32.totalorder %s27, 3
      %p58 = por %p56, %p57
      %p59 = scmp.ne.s32.totalorder %s51, %s54
      %p60 = scmp.eq.s32.totalorder %s27, 0
      %p61 = por %p59, %p60
      %p62 = scmp.ne.s32.totalorder %s51, %s54
      %p63 = scmp.eq.s32.totalorder %s32, 3
      %p64 = por %p62, %p63
      %p65 = scmp.ne.s32.totalorder %s54, %s55
      %p66 = scmp.eq.s32.totalorder %s32, 0
      %p67 = por %p65, %p66
      %p68 = scmp.ne.s32.totalorder %s54, %s55
      %p69 = scmp.eq.s32.totalorder %s33, 3
      %p70 = por %p68, %p69
      %p72 = scmp.ne.s32.totalorder %s55, %s71
      %p73 = scmp.eq.s32.totalorder %s33, 0
      %p74 = por %p72, %p73
      %s75 = ssub.s32 %s34, %s46
      %p76 = scmp.eq.s32.totalorder %s75, 0
      %s78 = sadd.s32 %s77, 1
      %s79 = scalar_select %p76, %s77, %s78
      %p82 = pneg %p76
      %p83 = scmp.eq.s32.totalorder %s27, 3
      %p84 = por %p82, %p83
      %p85 = scmp.ne.s32.totalorder %s77, %s80
      %p86 = scmp.eq.s32.totalorder %s27, 0
      %p87 = por %p85, %p86
      %p88 = scmp.ne.s32.totalorder %s77, %s80
      %p89 = scmp.eq.s32.totalorder %s32, 3
      %p90 = por %p88, %p89
      %p91 = scmp.ne.s32.totalorder %s80, %s81
      %p92 = scmp.eq.s32.totalorder %s32, 0
      %p93 = por %p91, %p92
      %p94 = scmp.ne.s32.totalorder %s80, %s81
      %p95 = scmp.eq.s32.totalorder %s33, 3
      %p96 = por %p94, %p95
      %p98 = scmp.ne.s32.totalorder %s81, %s97
      %p99 = scmp.eq.s32.totalorder %s33, 0
      %p100 = por %p98, %p99
      %s101 = ssub.s32 %s34, %s46
      %p102 = scmp.eq.s32.totalorder %s101, 0
      %s104 = sadd.s32 %s103, 1
      %s105 = scalar_select %p102, %s103, %s104
      %p108 = pneg %p102
      %p109 = scmp.eq.s32.totalorder %s27, 3
      %p110 = por %p108, %p109
      %p111 = scmp.ne.s32.totalorder %s103, %s106
      %p112 = scmp.eq.s32.totalorder %s27, 0
      %p113 = por %p111, %p112
      %p114 = scmp.ne.s32.totalorder %s103, %s106
      %p115 = scmp.eq.s32.totalorder %s32, 3
      %p116 = por %p114, %p115
      %p117 = scmp.ne.s32.totalorder %s106, %s107
      %p118 = scmp.eq.s32.totalorder %s32, 0
      %p119 = por %p117, %p118
      %p120 = scmp.ne.s32.totalorder %s106, %s107
      %p121 = scmp.eq.s32.totalorder %s33, 3
      %p122 = por %p120, %p121
      %p124 = scmp.ne.s32.totalorder %s107, %s123
      %p125 = scmp.eq.s32.totalorder %s33, 0
      %p126 = por %p124, %p125
      %s127 = ssub.s32 %s34, %s46
      %s128 = ssub.s32 %s35, %s42
      %s129 = sor.u32 %s127, %s128
      %p130 = scmp.eq.s32.totalorder %s129, 0
      %s132 = sadd.s32 %s131, 1
      %s133 = scalar_select %p130, %s131, %s132
      %p136 = pneg %p130
      %p137 = scmp.eq.s32.totalorder %s27, 3
      %p138 = por %p136, %p137
      %p139 = scmp.ne.s32.totalorder %s131, %s134
      %p140 = scmp.eq.s32.totalorder %s27, 0
      %p141 = por %p139, %p140
      %p142 = scmp.ne.s32.totalorder %s131, %s134
      %p143 = scmp.eq.s32.totalorder %s32, 3
      %p144 = por %p142, %p143
      %p145 = scmp.ne.s32.totalorder %s134, %s135
      %p146 = scmp.eq.s32.totalorder %s32, 0
      %p147 = por %p145, %p146
      %p148 = scmp.ne.s32.totalorder %s134, %s135
      %p149 = scmp.eq.s32.totalorder %s33, 3
      %p150 = por %p148, %p149
      %p152 = scmp.ne.s32.totalorder %s135, %s151
      %p153 = scmp.eq.s32.totalorder %s33, 0
      %p154 = por %p152, %p153
      %s155 = ssub.s32 %s34, %s46
      %s156 = ssub.s32 %s35, %s42
      %s157 = sor.u32 %s155, %s156
      %p158 = scmp.eq.s32.totalorder %s157, 0
      %s160 = sadd.s32 %s159, 1
      %s161 = scalar_select %p158, %s159, %s160
      %p164 = pneg %p158
      %p165 = scmp.eq.s32.totalorder %s27, 3
      %p166 = por %p164, %p165
      %p167 = scmp.ne.s32.totalorder %s159, %s162
      %p168 = scmp.eq.s32.totalorder %s27, 0
      %p169 = por %p167, %p168
      %p170 = scmp.ne.s32.totalorder %s159, %s162
      %p171 = scmp.eq.s32.totalorder %s32, 3
      %p172 = por %p170, %p171
      %p173 = scmp.ne.s32.totalorder %s162, %s163
      %p174 = scmp.eq.s32.totalorder %s32, 0
      %p175 = por %p173, %p174
      %p176 = scmp.ne.s32.totalorder %s162, %s163
      %p177 = scmp.eq.s32.totalorder %s33, 3
      %p178 = por %p176, %p177
      %p180 = scmp.ne.s32.totalorder %s163, %s179
      %p181 = scmp.eq.s32.totalorder %s33, 0
      %p182 = por %p180, %p181
      %s184 = sadd.s32 %s183, 1
      %p187 = scmp.eq.s32.totalorder %s27, 3
      %p188 = scmp.ne.s32.totalorder %s183, %s185
      %p189 = scmp.eq.s32.totalorder %s27, 0
      %p190 = por %p188, %p189
      %p191 = scmp.ne.s32.totalorder %s183, %s185
      %p192 = scmp.eq.s32.totalorder %s32, 3
      %p193 = por %p191, %p192
      %p194 = scmp.ne.s32.totalorder %s185, %s186
      %p195 = scmp.eq.s32.totalorder %s32, 0
      %p196 = por %p194, %p195
      %p197 = scmp.ne.s32.totalorder %s185, %s186
      %p198 = scmp.eq.s32.totalorder %s33, 3
      %p199 = por %p197, %p198
      %p201 = scmp.ne.s32.totalorder %s186, %s200
      %p202 = scmp.eq.s32.totalorder %s33, 0
      %p203 = por %p201, %p202
      %s205 = sadd.s32 %s204, 1
      %p208 = scmp.eq.s32.totalorder %s27, 3
      %p209 = scmp.ne.s32.totalorder %s204, %s206
      %p210 = scmp.eq.s32.totalorder %s27, 0
      %p211 = por %p209, %p210
      %p212 = scmp.ne.s32.totalorder %s204, %s206
      %p213 = scmp.eq.s32.totalorder %s32, 3
      %p214 = por %p212, %p213
      %p215 = scmp.ne.s32.totalorder %s206, %s207
      %p216 = scmp.eq.s32.totalorder %s32, 0
      %p217 = por %p215, %p216
      %p218 = scmp.ne.s32.totalorder %s206, %s207
      %p219 = scmp.eq.s32.totalorder %s33, 3
      %p220 = por %p218, %p219
      %p222 = scmp.ne.s32.totalorder %s207, %s221
      %p223 = scmp.eq.s32.totalorder %s33, 0
      %p224 = por %p222, %p223
      %s226 = sadd.s32 %s225, 1
      %p229 = scmp.eq.s32.totalorder %s27, 3
      %p230 = scmp.ne.s32.totalorder %s225, %s227
      %p231 = scmp.eq.s32.totalorder %s27, 0
      %p232 = por %p230, %p231
      %p233 = scmp.ne.s32.totalorder %s225, %s227
      %p234 = scmp.eq.s32.totalorder %s32, 3
      %p235 = por %p233, %p234
      %p236 = scmp.ne.s32.totalorder %s227, %s228
      %p237 = scmp.eq.s32.totalorder %s32, 0
      %p238 = por %p236, %p237
      %p239 = scmp.ne.s32.totalorder %s227, %s228
      %p240 = scmp.eq.s32.totalorder %s33, 3
      %p241 = por %p239, %p240
      %p243 = scmp.ne.s32.totalorder %s228, %s242
      %p244 = scmp.eq.s32.totalorder %s33, 0
      %p245 = por %p243, %p244
      %s247 = sadd.s32 %s246, 1
      %p250 = scmp.eq.s32.totalorder %s27, 3
      %p251 = scmp.ne.s32.totalorder %s246, %s248
      %p252 = scmp.eq.s32.totalorder %s27, 0
      %p253 = por %p251, %p252
      %p254 = scmp.ne.s32.totalorder %s246, %s248
      %p255 = scmp.eq.s32.totalorder %s32, 3
      %p256 = por %p254, %p255
      %p257 = scmp.ne.s32.totalorder %s248, %s249
      %p258 = scmp.eq.s32.totalorder %s32, 0
      %p259 = por %p257, %p258
      %p260 = scmp.ne.s32.totalorder %s248, %s249
      %p261 = scmp.eq.s32.totalorder %s33, 3
      %p262 = por %p260, %p261
      %p264 = scmp.ne.s32.totalorder %s249, %s263
      %p265 = scmp.eq.s32.totalorder %s33, 0
      %p266 = por %p264, %p265
      %s268 = sadd.s32 %s267, 1
      %p271 = scmp.eq.s32.totalorder %s27, 3
      %p272 = scmp.ne.s32.totalorder %s267, %s269
      %p273 = scmp.eq.s32.totalorder %s27, 0
      %p274 = por %p272, %p273
      %p275 = scmp.ne.s32.totalorder %s267, %s269
      %p276 = scmp.eq.s32.totalorder %s32, 3
      %p277 = por %p275, %p276
      %p278 = scmp.ne.s32.totalorder %s269, %s270
      %p279 = scmp.eq.s32.totalorder %s32, 0
      %p280 = por %p278, %p279
      %p281 = scmp.ne.s32.totalorder %s269, %s270
      %p282 = scmp.eq.s32.totalorder %s33, 3
      %p283 = por %p281, %p282
      %p285 = scmp.ne.s32.totalorder %s270, %s284
      %p286 = scmp.eq.s32.totalorder %s33, 0
      %p287 = por %p285, %p286
      %s289 = sadd.s32 %s288, 1
      %p292 = scmp.eq.s32.totalorder %s27, 3
      %p293 = scmp.ne.s32.totalorder %s288, %s290
      %p294 = scmp.eq.s32.totalorder %s27, 0
      %p295 = por %p293, %p294
      %p296 = scmp.ne.s32.totalorder %s288, %s290
      %p297 = scmp.eq.s32.totalorder %s32, 3
      %p298 = por %p296, %p297
      %p299 = scmp.ne.s32.totalorder %s290, %s291
      %p300 = scmp.eq.s32.totalorder %s32, 0
      %p301 = por %p299, %p300
      %p302 = scmp.ne.s32.totalorder %s290, %s291
      %p303 = scmp.eq.s32.totalorder %s33, 3
      %p304 = por %p302, %p303
      %p306 = scmp.ne.s32.totalorder %s291, %s305
      %p307 = scmp.eq.s32.totalorder %s33, 0
      %p308 = por %p306, %p307
      %s310 = sadd.s32 %s309, 1
      %p313 = scmp.eq.s32.totalorder %s27, 3
      %p314 = scmp.ne.s32.totalorder %s309, %s311
      %p315 = scmp.eq.s32.totalorder %s27, 0
      %p316 = por %p314, %p315
      %p317 = scmp.ne.s32.totalorder %s309, %s311
      %p318 = scmp.eq.s32.totalorder %s32, 3
      %p319 = por %p317, %p318
      %p320 = scmp.ne.s32.totalorder %s311, %s312
      %p321 = scmp.eq.s32.totalorder %s32, 0
      %p322 = por %p320, %p321
      %p323 = scmp.ne.s32.totalorder %s311, %s312
      %p324 = scmp.eq.s32.totalorder %s33, 3
      %p325 = por %p323, %p324
      %p327 = scmp.ne.s32.totalorder %s312, %s326
      %p328 = scmp.eq.s32.totalorder %s33, 0
      %p329 = por %p327, %p328
      %s331 = sadd.s32 %s330, 1
      %p334 = scmp.eq.s32.totalorder %s27, 3
      %p335 = scmp.ne.s32.totalorder %s330, %s332
      %p336 = scmp.eq.s32.totalorder %s27, 0
      %p337 = por %p335, %p336
      %p338 = scmp.ne.s32.totalorder %s330, %s332
      %p339 = scmp.eq.s32.totalorder %s32, 3
      %p340 = por %p338, %p339
      %p341 = scmp.ne.s32.totalorder %s332, %s333
      %p342 = scmp.eq.s32.totalorder %s32, 0
      %p343 = por %p341, %p342
      %p344 = scmp.ne.s32.totalorder %s332, %s333
      %p345 = scmp.eq.s32.totalorder %s33, 3
      %p346 = por %p344, %p345
      %p348 = scmp.ne.s32.totalorder %s333, %s347
      %p349 = scmp.eq.s32.totalorder %s33, 0
      %p350 = por %p348, %p349
      %s351 = ssub.s32 %s34, %s46
      %s352 = ssub.s32 %s35, %s42
      %s353 = sor.u32 %s351, %s352
      %p354 = scmp.eq.s32.totalorder %s353, 0
      %s356 = sadd.s32 %s355, 1
      %s357 = scalar_select %p354, %s355, %s356
      %p360 = pneg %p354
      %p361 = scmp.eq.s32.totalorder %s27, 3
      %p362 = por %p360, %p361
      %p363 = scmp.ne.s32.totalorder %s355, %s358
      %p364 = scmp.eq.s32.totalorder %s27, 0
      %p365 = por %p363, %p364
      %p366 = scmp.ne.s32.totalorder %s355, %s358
      %p367 = scmp.eq.s32.totalorder %s32, 3
      %p368 = por %p366, %p367
      %p369 = scmp.ne.s32.totalorder %s358, %s359
      %p370 = scmp.eq.s32.totalorder %s32, 0
      %p371 = por %p369, %p370
      %p372 = scmp.ne.s32.totalorder %s358, %s359
      %p373 = scmp.eq.s32.totalorder %s33, 3
      %p374 = por %p372, %p373
      %p376 = scmp.ne.s32.totalorder %s359, %s375
      %p377 = scmp.eq.s32.totalorder %s33, 0
      %p378 = por %p376, %p377
      %s379 = ssub.s32 %s34, %s46
      %s380 = ssub.s32 %s35, %s42
      %s381 = sor.u32 %s379, %s380
      %p382 = scmp.eq.s32.totalorder %s381, 0
      %s384 = sadd.s32 %s383, 1
      %s385 = scalar_select %p382, %s383, %s384
      %p388 = pneg %p382
      %p389 = scmp.eq.s32.totalorder %s27, 3
      %p390 = por %p388, %p389
      %p391 = scmp.ne.s32.totalorder %s383, %s386
      %p392 = scmp.eq.s32.totalorder %s27, 0
      %p393 = por %p391, %p392
      %p394 = scmp.ne.s32.totalorder %s383, %s386
      %p395 = scmp.eq.s32.totalorder %s32, 3
      %p396 = por %p394, %p395
      %p397 = scmp.ne.s32.totalorder %s386, %s387
      %p398 = scmp.eq.s32.totalorder %s32, 0
      %p399 = por %p397, %p398
      %p400 = scmp.ne.s32.totalorder %s386, %s387
      %p401 = scmp.eq.s32.totalorder %s33, 3
      %p402 = por %p400, %p401
      %p404 = scmp.ne.s32.totalorder %s387, %s403
      %p405 = scmp.eq.s32.totalorder %s33, 0
      %p406 = por %p404, %p405
      %p407 = scmp.le.s32.totalorder 1, %s27
      %p408 = scmp.lt.s32.totalorder %s27, 5
      %p409 = pnand %p407, %p408
      %p410 = pneg %p409
      // Predicated region
      $region9: #{tpu_custom_call.1} parent=5 // pred_check
        _
      $region10: #{tpu_custom_call.1} parent=5 // pred_check_branch
        %412 = sbr.rel (%p409) target = $region12
      $region11: #{tpu_custom_call.1} parent=5 // pred_region
        %s413 = ssub.s32 %s27, 1
        // Predicated region
        $region13: #{tpu_custom_call.1} parent=11 // pred_check
          %p414 = pneg %p196
        $region14: #{tpu_custom_call.1} parent=11 // pred_check_branch
          %416 = sbr.rel (%p414) target = $region16
        $region15: #{tpu_custom_call.1} parent=11 // pred_region
          _
        $region16: #{tpu_custom_call.1} parent=11 // pred_fallthru
          _
        // Predicated region
        $region17: #{tpu_custom_call.1} parent=11 // pred_check
          %p417 = pneg %p217
        $region18: #{tpu_custom_call.1} parent=11 // pred_check_branch
          %419 = sbr.rel (%p417) target = $region20
        $region19: #{tpu_custom_call.1} parent=11 // pred_region
          _
        $region20: #{tpu_custom_call.1} parent=11 // pred_fallthru
          _
        // Predicated region
        $region21: #{tpu_custom_call.1} parent=11 // pred_check
          %p420 = pneg %p238
        $region22: #{tpu_custom_call.1} parent=11 // pred_check_branch
          %422 = sbr.rel (%p420) target = $region24
        $region23: #{tpu_custom_call.1} parent=11 // pred_region
          _
        $region24: #{tpu_custom_call.1} parent=11 // pred_fallthru
          _
        // Predicated region
        $region25: #{tpu_custom_call.1} parent=11 // pred_check
          %p423 = pneg %p259
        $region26: #{tpu_custom_call.1} parent=11 // pred_check_branch
          %425 = sbr.rel (%p423) target = $region28
        $region27: #{tpu_custom_call.1} parent=11 // pred_region
          _
        $region28: #{tpu_custom_call.1} parent=11 // pred_fallthru
          _
        // Predicated region
        $region29: #{tpu_custom_call.1} parent=11 // pred_check
          %p426 = pneg %p280
        $region30: #{tpu_custom_call.1} parent=11 // pred_check_branch
          %428 = sbr.rel (%p426) target = $region32
        $region31: #{tpu_custom_call.1} parent=11 // pred_region
          _
        $region32: #{tpu_custom_call.1} parent=11 // pred_fallthru
          _
        // Predicated region
        $region33: #{tpu_custom_call.1} parent=11 // pred_check
          %p429 = pneg %p301
        $region34: #{tpu_custom_call.1} parent=11 // pred_check_branch
          %431 = sbr.rel (%p429) target = $region36
        $region35: #{tpu_custom_call.1} parent=11 // pred_region
          _
        $region36: #{tpu_custom_call.1} parent=11 // pred_fallthru
          _
        // Predicated region
        $region37: #{tpu_custom_call.1} parent=11 // pred_check
          %p432 = pneg %p322
        $region38: #{tpu_custom_call.1} parent=11 // pred_check_branch
          %434 = sbr.rel (%p432) target = $region40
        $region39: #{tpu_custom_call.1} parent=11 // pred_region
          _
        $region40: #{tpu_custom_call.1} parent=11 // pred_fallthru
          _
        // Predicated region
        $region41: #{tpu_custom_call.1} parent=11 // pred_check
          %p435 = pneg %p343
        $region42: #{tpu_custom_call.1} parent=11 // pred_check_branch
          %437 = sbr.rel (%p435) target = $region44
        $region43: #{tpu_custom_call.1} parent=11 // pred_region
          _
        $region44: #{tpu_custom_call.1} parent=11 // pred_fallthru
          _
      $region12: #{tpu_custom_call.1} parent=5 // pred_fallthru
        _
      %p438 = scmp.lt.s32.totalorder %s27, 4
      // Predicated region
      $region45: #{tpu_custom_call.1} parent=5 // pred_check
        %p439 = pneg %p438
      $region46: #{tpu_custom_call.1} parent=5 // pred_check_branch
        %441 = sbr.rel (%p439) target = $region48
      $region47: #{tpu_custom_call.1} parent=5 // pred_region
        // Predicated region
        $region49: #{tpu_custom_call.1} parent=47 // pred_check
          %p442 = pneg %p61
        $region50: #{tpu_custom_call.1} parent=47 // pred_check_branch
          %444 = sbr.rel (%p442) target = $region52
        $region51: #{tpu_custom_call.1} parent=47 // pred_region
          %s445 = smul.u32 2, %s35
          %p446 = scmp.lt.s32.totalorder %s34, 1
          %s447 = scalar_select %p446, %s34, 1
          %p448 = scmp.lt.s32.totalorder %s445, 3
          %s449 = scalar_select %p448, %s445, 3
          %s450 = smul.addr %s447, 4
          %s451 = sadd.s32 %s449, %s450
          %s452 = smul.addr %s451, 4
          %s453 = scalar_lea.vmem %s0, %s452
          %s454 = smul.u32 2, %s35
        $region52: #{tpu_custom_call.1} parent=47 // pred_fallthru
          _
        // Predicated region
        $region53: #{tpu_custom_call.1} parent=47 // pred_check
          %p455 = pneg %p87
        $region54: #{tpu_custom_call.1} parent=47 // pred_check_branch
          %457 = sbr.rel (%p455) target = $region56
        $region55: #{tpu_custom_call.1} parent=47 // pred_region
          %p458 = scmp.lt.s32.totalorder %s34, 1
          %s459 = scalar_select %p458, %s34, 1
          %s460 = smul.addr %s459, 16
          %s461 = smul.addr %s460, 4
          %s462 = scalar_lea.vmem %s1, %s461
        $region56: #{tpu_custom_call.1} parent=47 // pred_fallthru
          _
        // Predicated region
        $region57: #{tpu_custom_call.1} parent=47 // pred_check
          %p463 = pneg %p113
        $region58: #{tpu_custom_call.1} parent=47 // pred_check_branch
          %465 = sbr.rel (%p463) target = $region60
        $region59: #{tpu_custom_call.1} parent=47 // pred_region
          %p466 = scmp.lt.s32.totalorder %s34, 1
          %s467 = scalar_select %p466, %s34, 1
          %s468 = smul.addr %s467, 16
          %s469 = smul.addr %s468, 4
          %s470 = scalar_lea.vmem %s2, %s469
        $region60: #{tpu_custom_call.1} parent=47 // pred_fallthru
          _
        // Predicated region
        $region61: #{tpu_custom_call.1} parent=47 // pred_check
          %p471 = pneg %p141
        $region62: #{tpu_custom_call.1} parent=47 // pred_check_branch
          %473 = sbr.rel (%p471) target = $region64
        $region63: #{tpu_custom_call.1} parent=47 // pred_region
          %s474 = smul.u32 2, %s35
          %p475 = scmp.lt.s32.totalorder %s34, 1
          %s476 = scalar_select %p475, %s34, 1
          %p477 = scmp.lt.s32.totalorder %s474, 3
          %s478 = scalar_select %p477, %s474, 3
          %s479 = smul.addr %s476, 4
          %s480 = sadd.s32 %s478, %s479
          %s481 = smul.addr %s480, 8
          %s482 = scalar_lea.vmem %s3, %s481
          %s483 = smul.u32 2, %s35
        $region64: #{tpu_custom_call.1} parent=47 // pred_fallthru
          _
        // Predicated region
        $region65: #{tpu_custom_call.1} parent=47 // pred_check
          %p484 = pneg %p169
        $region66: #{tpu_custom_call.1} parent=47 // pred_check_branch
          %486 = sbr.rel (%p484) target = $region68
        $region67: #{tpu_custom_call.1} parent=47 // pred_region
          %s487 = smul.u32 2, %s35
          %p488 = scmp.lt.s32.totalorder %s34, 1
          %s489 = scalar_select %p488, %s34, 1
          %p490 = scmp.lt.s32.totalorder %s487, 3
          %s491 = scalar_select %p490, %s487, 3
          %s492 = smul.addr %s489, 4
          %s493 = sadd.s32 %s491, %s492
          %s494 = smul.addr %s493, 4
          %s495 = scalar_lea.vmem %s4, %s494
          %s496 = smul.u32 2, %s35
        $region68: #{tpu_custom_call.1} parent=47 // pred_fallthru
          _
      $region48: #{tpu_custom_call.1} parent=5 // pred_fallthru
        _
      %p497 = scmp.le.s32.totalorder 1, %s27
      %p498 = scmp.lt.s32.totalorder %s27, 5
      %p499 = pnand %p497, %p498
      %p500 = pneg %p499
      // Predicated region
      $region69: #{tpu_custom_call.1} parent=5 // pred_check
        _
      $region70: #{tpu_custom_call.1} parent=5 // pred_check_branch
        %502 = sbr.rel (%p499) target = $region72
      $region71: #{tpu_custom_call.1} parent=5 // pred_region
        %s503 = ssub.s32 %s27, 1
        %s504 = smul.u32 2, %s37
        %p505 = scmp.lt.s32.totalorder %s36, 1
        %s506 = scalar_select %p505, %s36, 1
        %p507 = scmp.lt.s32.totalorder %s504, 3
        %s508 = scalar_select %p507, %s504, 3
        %s509 = smul.addr %s506, 4
        %s510 = sadd.s32 %s508, %s509
        %s511 = smul.addr %s510, 4
        %s512 = scalar_lea.vmem %s0, %s511
        %p513 = pneg %p67
        %p514 = pneg %p64
        %p515 = scmp.lt.s32.totalorder %s36, 1
        %s516 = scalar_select %p515, %s36, 1
        %s517 = smul.addr %s516, 16
        %s518 = smul.addr %s517, 4
        %s519 = scalar_lea.vmem %s1, %s518
        %p520 = pneg %p93
        %p521 = pneg %p90
        %p522 = scmp.lt.s32.totalorder %s36, 1
        %s523 = scalar_select %p522, %s36, 1
        %s524 = smul.addr %s523, 16
        %s525 = smul.addr %s524, 4
        %s526 = scalar_lea.vmem %s2, %s525
        %p527 = pneg %p119
        %p528 = pneg %p116
        %s529 = smul.u32 2, %s37
        %p530 = scmp.lt.s32.totalorder %s36, 1
        %s531 = scalar_select %p530, %s36, 1
        %p532 = scmp.lt.s32.totalorder %s529, 3
        %s533 = scalar_select %p532, %s529, 3
        %s534 = smul.addr %s531, 4
        %s535 = sadd.s32 %s533, %s534
        %s536 = smul.addr %s535, 8
        %s537 = scalar_lea.vmem %s3, %s536
        %p538 = pneg %p147
        %p539 = pneg %p144
        %s540 = smul.u32 2, %s37
        %p541 = scmp.lt.s32.totalorder %s36, 1
        %s542 = scalar_select %p541, %s36, 1
        %p543 = scmp.lt.s32.totalorder %s540, 3
        %s544 = scalar_select %p543, %s540, 3
        %s545 = smul.addr %s542, 4
        %s546 = sadd.s32 %s544, %s545
        %s547 = smul.addr %s546, 4
        %s548 = scalar_lea.vmem %s4, %s547
        %p549 = pneg %p175
        %p550 = pneg %p172
        %p551 = pneg %p196
        %p552 = pneg %p193
        %p553 = pneg %p217
        %p554 = pneg %p214
        %p555 = pneg %p238
        %p556 = pneg %p235
        %p557 = pneg %p259
        %p558 = pneg %p256
        %p559 = pneg %p280
        %p560 = pneg %p277
        %p561 = pneg %p301
        %p562 = pneg %p298
        %p563 = pneg %p322
        %p564 = pneg %p319
        %p565 = pneg %p343
        %p566 = pneg %p340
        %p567 = pneg %p371
        %p568 = pneg %p368
        %s569 = sand.u32 %s358, 1
        %s570 = scalar_lea.sflag [#allocation5], %s569
        %s571 = sand.u32 %s358, 1
        %s572 = smul.addr %s571, 16
        %s573 = scalar_lea.vmem [#allocation4], %s572
        %p574 = pneg %p399
        %p575 = pneg %p396
        %s576 = sand.u32 %s386, 1
        %s577 = scalar_lea.sflag [#allocation7], %s576
        %s578 = sand.u32 %s386, 1
        %s579 = smul.addr %s578, 32
        %s580 = scalar_lea.vmem [#allocation6], %s579
        %s581 = smul.u32 2, %s37
        %p582 = scmp.lt.s32.totalorder %s36, 1
        %s583 = scalar_select %p582, %s36, 1
        %p584 = scmp.lt.s32.totalorder %s581, 3
        %s585 = scalar_select %p584, %s581, 3
        %s586 = smul.addr %s583, 4
        %s587 = sadd.s32 %s585, %s586
        %s588 = smul.addr %s587, 4
        %s589 = scalar_lea.vmem %s0, %s588
        %s590 = smul.u32 2, %s37
        %p591 = scmp.lt.s32.totalorder %s36, 1
        %s592 = scalar_select %p591, %s36, 1
        %s593 = smul.addr %s592, 16
        %s594 = smul.addr %s593, 4
        %s595 = scalar_lea.vmem %s1, %s594
        %p596 = scmp.lt.s32.totalorder %s36, 1
        %s597 = scalar_select %p596, %s36, 1
        %s598 = smul.addr %s597, 16
        %s599 = smul.addr %s598, 4
        %s600 = scalar_lea.vmem %s2, %s599
        %s601 = smul.u32 2, %s37
        %p602 = scmp.lt.s32.totalorder %s36, 1
        %s603 = scalar_select %p602, %s36, 1
        %p604 = scmp.lt.s32.totalorder %s601, 3
        %s605 = scalar_select %p604, %s601, 3
        %s606 = smul.addr %s603, 4
        %s607 = sadd.s32 %s605, %s606
        %s608 = smul.addr %s607, 8
        %s609 = scalar_lea.vmem %s3, %s608
        %s610 = smul.u32 2, %s37
        %s611 = smul.u32 2, %s37
        %p612 = scmp.lt.s32.totalorder %s36, 1
        %s613 = scalar_select %p612, %s36, 1
        %p614 = scmp.lt.s32.totalorder %s611, 3
        %s615 = scalar_select %p614, %s611, 3
        %s616 = smul.addr %s613, 4
        %s617 = sadd.s32 %s615, %s616
        %s618 = smul.addr %s617, 4
        %s619 = scalar_lea.vmem %s4, %s618
        %s620 = smul.u32 2, %s37
        %s621 = smul.u32 2, %s37
        %s622 = smul.u32 2, %s37
        %p624 = scmp.eq.s32.totalorder %s37, 0
        // Predicated region
        $region73: #{tpu_custom_call.1} parent=71 // pred_check
          %p625 = pneg %p624
        $region74: #{tpu_custom_call.1} parent=71 // pred_check_branch
          %627 = sbr.rel (%p625) target = $region76
        $region75: #{tpu_custom_call.1} parent=71 // pred_region
          %v628 = vld [vmem:[%s595] sm:$0xf]
          %v629 = vld [vmem:[%s595 + $0x4] sm:$0xf]
          %v630 = vld [vmem:[%s595 + $0x8] sm:$0xf]
          %v631 = vld [vmem:[%s595 + $0xc] sm:$0xf]
          %v632 = vld [vmem:[%s595 + $0x10] sm:$0xf]
          %v633 = vld [vmem:[%s595 + $0x14] sm:$0xf]
          %v634 = vld [vmem:[%s595 + $0x18] sm:$0xf]
          %v635 = vld [vmem:[%s595 + $0x1c] sm:$0xf]
          %v636 = vld [vmem:[%s595 + $0x20] sm:$0xf]
          %v637 = vld [vmem:[%s595 + $0x24] sm:$0xf]
          %v638 = vld [vmem:[%s595 + $0x28] sm:$0xf]
          %v639 = vld [vmem:[%s595 + $0x2c] sm:$0xf]
          %v640 = vld [vmem:[%s595 + $0x30] sm:$0xf]
          %v641 = vld [vmem:[%s595 + $0x34] sm:$0xf]
          %v642 = vld [vmem:[%s595 + $0x38] sm:$0xf]
          %v643 = vld [vmem:[%s595 + $0x3c] sm:$0xf]
          %v644 = vld [vmem:[%s7] sm:$0xf]
          %v645 = vld [vmem:[%s7 + $0x4] sm:$0xf]
          %v646 = vld [vmem:[%s7 + $0x8] sm:$0xf]
          %v647 = vld [vmem:[%s7 + $0xc] sm:$0xf]
          %v648 = vld [vmem:[%s8] sm:$0x1]
          %v650 = vperm.slane %v648, 0
          %v668 = vunpack.c.l.b16 %v628
          %v669 = vunpack.c.l.b16 %v629
          %v670 = vunpack.c.l.b16 %v630
          %v671 = vunpack.c.l.b16 %v631
          %v672 = vunpack.c.l.b16 %v632
          %v673 = vunpack.c.l.b16 %v633
          %v674 = vunpack.c.l.b16 %v634
          %v675 = vunpack.c.l.b16 %v635
          %v676 = vunpack.c.l.b16 %v636
          %v677 = vunpack.c.l.b16 %v637
          %v678 = vunpack.c.l.b16 %v638
          %v679 = vunpack.c.l.b16 %v639
          %v680 = vunpack.c.l.b16 %v640
          %v681 = vunpack.c.l.b16 %v641
          %v682 = vunpack.c.l.b16 %v642
          %v683 = vunpack.c.l.b16 %v643
          %v684 = vpack.c.b16 %v669, %v668
          %v685 = vpack.c.b16 %v671, %v670
          %v686 = vpack.c.b16 %v673, %v672
          %v687 = vpack.c.b16 %v675, %v674
          %v688 = vpack.c.b16 %v677, %v676
          %v689 = vpack.c.b16 %v679, %v678
          %v690 = vpack.c.b16 %v681, %v680
          %v691 = vpack.c.b16 %v683, %v682
          %v696 = vunpack.c.l.b16 %v644
          %v697 = vunpack.c.l.b16 %v645
          %v698 = vunpack.c.l.b16 %v646
          %v699 = vunpack.c.l.b16 %v647
          %v700 = vpack.c.b16 %v697, %v696
          %v701 = vpack.c.b16 %v699, %v698
          %vm704 = vcmask 261120
          %v706 = vsel %vm704, %v684, 0
          %v709 = vsel %vm704, %v685, 0
          %v712 = vsel %vm704, %v686, 0
          %v715 = vsel %vm704, %v687, 0
          %v718 = vsel %vm704, %v688, 0
          %v721 = vsel %vm704, %v689, 0
          %v724 = vsel %vm704, %v690, 0
          %v727 = vsel %vm704, %v691, 0
          %729 = vmatpush.bf16.msra.mxu0 0
          %730 = vmatpush.bf16.msra.mxu0 0
          %731 = vmatpush.bf16.msra.mxu0 0
          %732 = vmatpush.bf16.msra.mxu0 0
          %733 = vmatpush.bf16.msra.mxu0 0
          %734 = vmatpush.bf16.msra.mxu0 0
          %735 = vmatpush.bf16.msra.mxu0 %v701
          %736 = vmatpush.bf16.msra.mxu0 %v700
          %737 = vmatmul.bf16.gmra.mxu0 %v706
          %v738 = vpop.f32.mrf.mxu0
          %v739 = vadd.f32 %v650, %v738
          %v740 = vpop.f32.mrf.mxu0
          %v741 = vadd.f32 %v650, %v740
          %742 = vmatmul.bf16.gmra.mxu0 %v709
          %v743 = vpop.f32.mrf.mxu0
          %v744 = vadd.f32 %v650, %v743
          %v745 = vpop.f32.mrf.mxu0
          %v746 = vadd.f32 %v650, %v745
          %747 = vmatmul.bf16.gmra.mxu0 %v712
          %v748 = vpop.f32.mrf.mxu0
          %v749 = vadd.f32 %v650, %v748
          %v750 = vpop.f32.mrf.mxu0
          %v751 = vadd.f32 %v650, %v750
          %752 = vmatmul.bf16.gmra.mxu0 %v715
          %v753 = vpop.f32.mrf.mxu0
          %v754 = vadd.f32 %v650, %v753
          %v755 = vpop.f32.mrf.mxu0
          %v756 = vadd.f32 %v650, %v755
          %757 = vmatmul.bf16.gmra.mxu0 %v718
          %v758 = vpop.f32.mrf.mxu0
          %v759 = vadd.f32 %v650, %v758
          %v760 = vpop.f32.mrf.mxu0
          %v761 = vadd.f32 %v650, %v760
          %762 = vmatmul.bf16.gmra.mxu0 %v721
          %v763 = vpop.f32.mrf.mxu0
          %v764 = vadd.f32 %v650, %v763
          %v765 = vpop.f32.mrf.mxu0
          %v766 = vadd.f32 %v650, %v765
          %767 = vmatmul.bf16.gmra.mxu0 %v724
          %v768 = vpop.f32.mrf.mxu0
          %v769 = vadd.f32 %v650, %v768
          %v770 = vpop.f32.mrf.mxu0
          %v771 = vadd.f32 %v650, %v770
          %772 = vmatmul.bf16.gmra.mxu0 %v727
          %v773 = vpop.f32.mrf.mxu0
          %v774 = vadd.f32 %v650, %v773
          %v775 = vpop.f32.mrf.mxu0
          %v776 = vadd.f32 %v650, %v775
          %777 = vdwg.mxu0
          %v778 = vld [vmem:[%s600] sm:$0xf]
          %v779 = vld [vmem:[%s600 + $0x4] sm:$0xf]
          %v780 = vld [vmem:[%s600 + $0x8] sm:$0xf]
          %v781 = vld [vmem:[%s600 + $0xc] sm:$0xf]
          %v782 = vld [vmem:[%s600 + $0x10] sm:$0xf]
          %v783 = vld [vmem:[%s600 + $0x14] sm:$0xf]
          %v784 = vld [vmem:[%s600 + $0x18] sm:$0xf]
          %v785 = vld [vmem:[%s600 + $0x1c] sm:$0xf]
          %v786 = vld [vmem:[%s600 + $0x20] sm:$0xf]
          %v787 = vld [vmem:[%s600 + $0x24] sm:$0xf]
          %v788 = vld [vmem:[%s600 + $0x28] sm:$0xf]
          %v789 = vld [vmem:[%s600 + $0x2c] sm:$0xf]
          %v790 = vld [vmem:[%s600 + $0x30] sm:$0xf]
          %v791 = vld [vmem:[%s600 + $0x34] sm:$0xf]
          %v792 = vld [vmem:[%s600 + $0x38] sm:$0xf]
          %v793 = vld [vmem:[%s600 + $0x3c] sm:$0xf]
          %v794 = vld [vmem:[%s9] sm:$0xf]
          %v795 = vld [vmem:[%s9 + $0x4] sm:$0xf]
          %v796 = vld [vmem:[%s9 + $0x8] sm:$0xf]
          %v797 = vld [vmem:[%s9 + $0xc] sm:$0xf]
          %v798 = vld [vmem:[%s10] sm:$0x1]
          %v800 = vperm.slane %v798, 0
          %v818 = vunpack.c.l.b16 %v778
          %v819 = vunpack.c.l.b16 %v779
          %v820 = vunpack.c.l.b16 %v780
          %v821 = vunpack.c.l.b16 %v781
          %v822 = vunpack.c.l.b16 %v782
          %v823 = vunpack.c.l.b16 %v783
          %v824 = vunpack.c.l.b16 %v784
          %v825 = vunpack.c.l.b16 %v785
          %v826 = vunpack.c.l.b16 %v786
          %v827 = vunpack.c.l.b16 %v787
          %v828 = vunpack.c.l.b16 %v788
          %v829 = vunpack.c.l.b16 %v789
          %v830 = vunpack.c.l.b16 %v790
          %v831 = vunpack.c.l.b16 %v791
          %v832 = vunpack.c.l.b16 %v792
          %v833 = vunpack.c.l.b16 %v793
          %v834 = vpack.c.b16 %v819, %v818
          %v835 = vpack.c.b16 %v821, %v820
          %v836 = vpack.c.b16 %v823, %v822
          %v837 = vpack.c.b16 %v825, %v824
          %v838 = vpack.c.b16 %v827, %v826
          %v839 = vpack.c.b16 %v829, %v828
          %v840 = vpack.c.b16 %v831, %v830
          %v841 = vpack.c.b16 %v833, %v832
          %v846 = vunpack.c.l.b16 %v794
          %v847 = vunpack.c.l.b16 %v795
          %v848 = vunpack.c.l.b16 %v796
          %v849 = vunpack.c.l.b16 %v797
          %v850 = vpack.c.b16 %v847, %v846
          %v851 = vpack.c.b16 %v849, %v848
          %v855 = vsel %vm704, %v834, 0
          %v858 = vsel %vm704, %v835, 0
          %v861 = vsel %vm704, %v836, 0
          %v864 = vsel %vm704, %v837, 0
          %v867 = vsel %vm704, %v838, 0
          %v870 = vsel %vm704, %v839, 0
          %v873 = vsel %vm704, %v840, 0
          %v876 = vsel %vm704, %v841, 0
          %878 = vmatpush.bf16.msra.mxu0 0
          %879 = vmatpush.bf16.msra.mxu0 0
          %880 = vmatpush.bf16.msra.mxu0 0
          %881 = vmatpush.bf16.msra.mxu0 0
          %882 = vmatpush.bf16.msra.mxu0 0
          %883 = vmatpush.bf16.msra.mxu0 0
          %884 = vmatpush.bf16.msra.mxu0 %v851
          %885 = vmatpush.bf16.msra.mxu0 %v850
          %886 = vmatmul.bf16.gmra.mxu0 %v855
          %v887 = vpop.f32.mrf.mxu0
          %v888 = vadd.f32 %v800, %v887
          %v889 = vpop.f32.mrf.mxu0
          %v890 = vadd.f32 %v800, %v889
          %891 = vmatmul.bf16.gmra.mxu0 %v858
          %v892 = vpop.f32.mrf.mxu0
          %v893 = vadd.f32 %v800, %v892
          %v894 = vpop.f32.mrf.mxu0
          %v895 = vadd.f32 %v800, %v894
          %896 = vmatmul.bf16.gmra.mxu0 %v861
          %v897 = vpop.f32.mrf.mxu0
          %v898 = vadd.f32 %v800, %v897
          %v899 = vpop.f32.mrf.mxu0
          %v900 = vadd.f32 %v800, %v899
          %901 = vmatmul.bf16.gmra.mxu0 %v864
          %v902 = vpop.f32.mrf.mxu0
          %v903 = vadd.f32 %v800, %v902
          %v904 = vpop.f32.mrf.mxu0
          %v905 = vadd.f32 %v800, %v904
          %906 = vmatmul.bf16.gmra.mxu0 %v867
          %v907 = vpop.f32.mrf.mxu0
          %v908 = vadd.f32 %v800, %v907
          %v909 = vpop.f32.mrf.mxu0
          %v910 = vadd.f32 %v800, %v909
          %911 = vmatmul.bf16.gmra.mxu0 %v870
          %v912 = vpop.f32.mrf.mxu0
          %v913 = vadd.f32 %v800, %v912
          %v914 = vpop.f32.mrf.mxu0
          %v915 = vadd.f32 %v800, %v914
          %916 = vmatmul.bf16.gmra.mxu0 %v873
          %v917 = vpop.f32.mrf.mxu0
          %v918 = vadd.f32 %v800, %v917
          %v919 = vpop.f32.mrf.mxu0
          %v920 = vadd.f32 %v800, %v919
          %921 = vmatmul.bf16.gmra.mxu0 %v876
          %v922 = vpop.f32.mrf.mxu0
          %v923 = vadd.f32 %v800, %v922
          %v924 = vpop.f32.mrf.mxu0
          %v925 = vadd.f32 %v800, %v924
          %926 = vdwg.mxu0
          %v927 = vlaneseq
          %v928 = vshrl.u32 %v927, 7
          %v929 = vadd.s32 %v928, 8
          %v930 = vadd.s32 %v928, 16
          %v931 = vadd.s32 %v928, 24
          %v932 = vadd.s32 %v928, 32
          %v933 = vadd.s32 %v928, 40
          %v934 = vadd.s32 %v928, 48
          %v935 = vadd.s32 %v928, 56
          %v936 = vadd.s32 %v928, 64
          %v937 = vadd.s32 %v928, 72
          %v938 = vadd.s32 %v928, 80
          %v939 = vadd.s32 %v928, 88
          %v940 = vadd.s32 %v928, 96
          %v941 = vadd.s32 %v928, 104
          %v942 = vadd.s32 %v928, 112
          %v943 = vadd.s32 %v928, 120
          %vm944 = vcmp.lt.s32.totalorder %v928, 24
          %vm945 = vcmp.lt.s32.totalorder %v929, 24
          %vm946 = vcmp.lt.s32.totalorder %v930, 24
          %vm947 = vcmp.lt.s32.totalorder %v931, 24
          %vm948 = vcmp.lt.s32.totalorder %v932, 24
          %vm949 = vcmp.lt.s32.totalorder %v933, 24
          %vm950 = vcmp.lt.s32.totalorder %v934, 24
          %vm951 = vcmp.lt.s32.totalorder %v935, 24
          %vm952 = vcmp.lt.s32.totalorder %v936, 24
          %vm953 = vcmp.lt.s32.totalorder %v937, 24
          %vm954 = vcmp.lt.s32.totalorder %v938, 24
          %vm955 = vcmp.lt.s32.totalorder %v939, 24
          %vm956 = vcmp.lt.s32.totalorder %v940, 24
          %vm957 = vcmp.lt.s32.totalorder %v941, 24
          %vm958 = vcmp.lt.s32.totalorder %v942, 24
          %vm959 = vcmp.lt.s32.totalorder %v943, 24
          %v960 = vsel %vm944, 1, 0
          %v961 = vsel %vm945, 1, 0
          %v962 = vsel %vm946, 1, 0
          %v963 = vsel %vm947, 1, 0
          %v964 = vsel %vm948, 1, 0
          %v965 = vsel %vm949, 1, 0
          %v966 = vsel %vm950, 1, 0
          %v967 = vsel %vm951, 1, 0
          %v968 = vsel %vm952, 1, 0
          %v969 = vsel %vm953, 1, 0
          %v970 = vsel %vm954, 1, 0
          %v971 = vsel %vm955, 1, 0
          %v972 = vsel %vm956, 1, 0
          %v973 = vsel %vm957, 1, 0
          %v974 = vsel %vm958, 1, 0
          %v975 = vsel %vm959, 1, 0
          %vm976 = vcmp.eq.s32.totalorder %v960, 1
          %vm977 = vcmp.eq.s32.totalorder %v961, 1
          %vm978 = vcmp.eq.s32.totalorder %v962, 1
          %vm979 = vcmp.eq.s32.totalorder %v963, 1
          %vm980 = vcmp.eq.s32.totalorder %v964, 1
          %vm981 = vcmp.eq.s32.totalorder %v965, 1
          %vm982 = vcmp.eq.s32.totalorder %v966, 1
          %vm983 = vcmp.eq.s32.totalorder %v967, 1
          %vm984 = vcmp.eq.s32.totalorder %v968, 1
          %vm985 = vcmp.eq.s32.totalorder %v969, 1
          %vm986 = vcmp.eq.s32.totalorder %v970, 1
          %vm987 = vcmp.eq.s32.totalorder %v971, 1
          %vm988 = vcmp.eq.s32.totalorder %v972, 1
          %vm989 = vcmp.eq.s32.totalorder %v973, 1
          %vm990 = vcmp.eq.s32.totalorder %v974, 1
          %vm991 = vcmp.eq.s32.totalorder %v975, 1
          %v992 = vsel %vm976, %v888, 0.0
          %v993 = vsel %vm977, %v890, 0.0
          %v994 = vsel %vm978, %v893, 0.0
          %v995 = vsel %vm979, %v895, 0.0
          %v996 = vsel %vm980, %v898, 0.0
          %v997 = vsel %vm981, %v900, 0.0
          %v998 = vsel %vm982, %v903, 0.0
          %v999 = vsel %vm983, %v905, 0.0
          %v1000 = vsel %vm984, %v908, 0.0
          %v1001 = vsel %vm985, %v910, 0.0
          %v1002 = vsel %vm986, %v913, 0.0
          %v1003 = vsel %vm987, %v915, 0.0
          %v1004 = vsel %vm988, %v918, 0.0
          %v1005 = vsel %vm989, %v920, 0.0
          %v1006 = vsel %vm990, %v923, 0.0
          %v1007 = vsel %vm991, %v925, 0.0
          %v1008 = vpack.c.bf16 %v739, %v739
          %v1009 = vpack.c.bf16 %v741, %v741
          %v1010 = vpack.c.bf16 %v744, %v744
          %v1011 = vpack.c.bf16 %v746, %v746
          %v1012 = vpack.c.bf16 %v749, %v749
          %v1013 = vpack.c.bf16 %v751, %v751
          %v1014 = vpack.c.bf16 %v754, %v754
          %v1015 = vpack.c.bf16 %v756, %v756
          %v1016 = vpack.c.bf16 %v759, %v759
          %v1017 = vpack.c.bf16 %v761, %v761
          %v1018 = vpack.c.bf16 %v764, %v764
          %v1019 = vpack.c.bf16 %v766, %v766
          %v1020 = vpack.c.bf16 %v769, %v769
          %v1021 = vpack.c.bf16 %v771, %v771
          %v1022 = vpack.c.bf16 %v774, %v774
          %v1023 = vpack.c.bf16 %v776, %v776
          %v1024 = vpack.c.bf16 %v992, %v992
          %v1025 = vpack.c.bf16 %v993, %v993
          %v1026 = vpack.c.bf16 %v994, %v994
          %v1027 = vpack.c.bf16 %v995, %v995
          %v1028 = vpack.c.bf16 %v996, %v996
          %v1029 = vpack.c.bf16 %v997, %v997
          %v1030 = vpack.c.bf16 %v998, %v998
          %v1031 = vpack.c.bf16 %v999, %v999
          %v1032 = vpack.c.bf16 %v1000, %v1000
          %v1033 = vpack.c.bf16 %v1001, %v1001
          %v1034 = vpack.c.bf16 %v1002, %v1002
          %v1035 = vpack.c.bf16 %v1003, %v1003
          %v1036 = vpack.c.bf16 %v1004, %v1004
          %v1037 = vpack.c.bf16 %v1005, %v1005
          %v1038 = vpack.c.bf16 %v1006, %v1006
          %v1039 = vpack.c.bf16 %v1007, %v1007
          %vm1040 = vcmask 60416
          %1041 = vst.msk [vmem:[#allocation2] sm:$0xf] %vm1040, %v1008
          %1042 = vst.msk [vmem:[#allocation2 + $0x4] sm:$0xf] %vm1040, %v1009
          %1043 = vst.msk [vmem:[#allocation2 + $0x8] sm:$0xf] %vm1040, %v1010
          %1044 = vst.msk [vmem:[#allocation2 + $0xc] sm:$0xf] %vm1040, %v1011
          %1045 = vst.msk [vmem:[#allocation2 + $0x10] sm:$0xf] %vm1040, %v1012
          %1046 = vst.msk [vmem:[#allocation2 + $0x14] sm:$0xf] %vm1040, %v1013
          %1047 = vst.msk [vmem:[#allocation2 + $0x18] sm:$0xf] %vm1040, %v1014
          %1048 = vst.msk [vmem:[#allocation2 + $0x1c] sm:$0xf] %vm1040, %v1015
          %1049 = vst.msk [vmem:[#allocation2 + $0x20] sm:$0xf] %vm1040, %v1016
          %1050 = vst.msk [vmem:[#allocation2 + $0x24] sm:$0xf] %vm1040, %v1017
          %1051 = vst.msk [vmem:[#allocation2 + $0x28] sm:$0xf] %vm1040, %v1018
          %1052 = vst.msk [vmem:[#allocation2 + $0x2c] sm:$0xf] %vm1040, %v1019
          %1053 = vst.msk [vmem:[#allocation2 + $0x30] sm:$0xf] %vm1040, %v1020
          %1054 = vst.msk [vmem:[#allocation2 + $0x34] sm:$0xf] %vm1040, %v1021
          %1055 = vst.msk [vmem:[#allocation2 + $0x38] sm:$0xf] %vm1040, %v1022
          %1056 = vst.msk [vmem:[#allocation2 + $0x3c] sm:$0xf] %vm1040, %v1023
          %1057 = vst.msk [vmem:[#allocation3] sm:$0xf] %vm1040, %v1024
          %1058 = vst.msk [vmem:[#allocation3 + $0x4] sm:$0xf] %vm1040, %v1025
          %1059 = vst.msk [vmem:[#allocation3 + $0x8] sm:$0xf] %vm1040, %v1026
          %1060 = vst.msk [vmem:[#allocation3 + $0xc] sm:$0xf] %vm1040, %v1027
          %1061 = vst.msk [vmem:[#allocation3 + $0x10] sm:$0xf] %vm1040, %v1028
          %1062 = vst.msk [vmem:[#allocation3 + $0x14] sm:$0xf] %vm1040, %v1029
          %1063 = vst.msk [vmem:[#allocation3 + $0x18] sm:$0xf] %vm1040, %v1030
          %1064 = vst.msk [vmem:[#allocation3 + $0x1c] sm:$0xf] %vm1040, %v1031
          %1065 = vst.msk [vmem:[#allocation3 + $0x20] sm:$0xf] %vm1040, %v1032
          %1066 = vst.msk [vmem:[#allocation3 + $0x24] sm:$0xf] %vm1040, %v1033
          %1067 = vst.msk [vmem:[#allocation3 + $0x28] sm:$0xf] %vm1040, %v1034
          %1068 = vst.msk [vmem:[#allocation3 + $0x2c] sm:$0xf] %vm1040, %v1035
          %1069 = vst.msk [vmem:[#allocation3 + $0x30] sm:$0xf] %vm1040, %v1036
          %1070 = vst.msk [vmem:[#allocation3 + $0x34] sm:$0xf] %vm1040, %v1037
          %1071 = vst.msk [vmem:[#allocation3 + $0x38] sm:$0xf] %vm1040, %v1038
          %1072 = vst.msk [vmem:[#allocation3 + $0x3c] sm:$0xf] %vm1040, %v1039
          %1089 = vrot.lane.b32.xlu0 %v1008, 120
          %v1090 = vpop.permute.xlu0 %1089
          %1091 = vrot.lane.b32.xlu0 %v1009, 120
          %v1092 = vpop.permute.xlu0 %1091
          %1093 = vrot.lane.b32.xlu0 %v1010, 120
          %v1094 = vpop.permute.xlu0 %1093
          %1095 = vrot.lane.b32.xlu0 %v1011, 120
          %v1096 = vpop.permute.xlu0 %1095
          %1097 = vrot.lane.b32.xlu0 %v1012, 120
          %v1098 = vpop.permute.xlu0 %1097
          %1099 = vrot.lane.b32.xlu0 %v1013, 120
          %v1100 = vpop.permute.xlu0 %1099
          %1101 = vrot.lane.b32.xlu0 %v1014, 120
          %v1102 = vpop.permute.xlu0 %1101
          %1103 = vrot.lane.b32.xlu0 %v1015, 120
          %v1104 = vpop.permute.xlu0 %1103
          %1105 = vrot.lane.b32.xlu0 %v1016, 120
          %v1106 = vpop.permute.xlu0 %1105
          %1107 = vrot.lane.b32.xlu0 %v1017, 120
          %v1108 = vpop.permute.xlu0 %1107
          %1109 = vrot.lane.b32.xlu0 %v1018, 120
          %v1110 = vpop.permute.xlu0 %1109
          %1111 = vrot.lane.b32.xlu0 %v1019, 120
          %v1112 = vpop.permute.xlu0 %1111
          %1113 = vrot.lane.b32.xlu0 %v1020, 120
          %v1114 = vpop.permute.xlu0 %1113
          %1115 = vrot.lane.b32.xlu0 %v1021, 120
          %v1116 = vpop.permute.xlu0 %1115
          %1117 = vrot.lane.b32.xlu0 %v1022, 120
          %v1118 = vpop.permute.xlu0 %1117
          %1119 = vrot.lane.b32.xlu0 %v1023, 120
          %v1120 = vpop.permute.xlu0 %1119
          %s1137 = scalar_lea.vmem [#allocation2], 64
          %1138 = vst.msk [vmem:[%s1137] sm:$0xf] %vm1040, %v1090
          %1139 = vst.msk [vmem:[%s1137 + $0x4] sm:$0xf] %vm1040, %v1092
          %1140 = vst.msk [vmem:[%s1137 + $0x8] sm:$0xf] %vm1040, %v1094
          %1141 = vst.msk [vmem:[%s1137 + $0xc] sm:$0xf] %vm1040, %v1096
          %1142 = vst.msk [vmem:[%s1137 + $0x10] sm:$0xf] %vm1040, %v1098
          %1143 = vst.msk [vmem:[%s1137 + $0x14] sm:$0xf] %vm1040, %v1100
          %1144 = vst.msk [vmem:[%s1137 + $0x18] sm:$0xf] %vm1040, %v1102
          %1145 = vst.msk [vmem:[%s1137 + $0x1c] sm:$0xf] %vm1040, %v1104
          %1146 = vst.msk [vmem:[%s1137 + $0x20] sm:$0xf] %vm1040, %v1106
          %1147 = vst.msk [vmem:[%s1137 + $0x24] sm:$0xf] %vm1040, %v1108
          %1148 = vst.msk [vmem:[%s1137 + $0x28] sm:$0xf] %vm1040, %v1110
          %1149 = vst.msk [vmem:[%s1137 + $0x2c] sm:$0xf] %vm1040, %v1112
          %1150 = vst.msk [vmem:[%s1137 + $0x30] sm:$0xf] %vm1040, %v1114
          %1151 = vst.msk [vmem:[%s1137 + $0x34] sm:$0xf] %vm1040, %v1116
          %1152 = vst.msk [vmem:[%s1137 + $0x38] sm:$0xf] %vm1040, %v1118
          %1153 = vst.msk [vmem:[%s1137 + $0x3c] sm:$0xf] %vm1040, %v1120
          %1170 = vrot.lane.b32.xlu0 %v1024, 120
          %v1171 = vpop.permute.xlu0 %1170
          %1172 = vrot.lane.b32.xlu0 %v1025, 120
          %v1173 = vpop.permute.xlu0 %1172
          %1174 = vrot.lane.b32.xlu0 %v1026, 120
          %v1175 = vpop.permute.xlu0 %1174
          %1176 = vrot.lane.b32.xlu0 %v1027, 120
          %v1177 = vpop.permute.xlu0 %1176
          %1178 = vrot.lane.b32.xlu0 %v1028, 120
          %v1179 = vpop.permute.xlu0 %1178
          %1180 = vrot.lane.b32.xlu0 %v1029, 120
          %v1181 = vpop.permute.xlu0 %1180
          %1182 = vrot.lane.b32.xlu0 %v1030, 120
          %v1183 = vpop.permute.xlu0 %1182
          %1184 = vrot.lane.b32.xlu0 %v1031, 120
          %v1185 = vpop.permute.xlu0 %1184
          %1186 = vrot.lane.b32.xlu0 %v1032, 120
          %v1187 = vpop.permute.xlu0 %1186
          %1188 = vrot.lane.b32.xlu0 %v1033, 120
          %v1189 = vpop.permute.xlu0 %1188
          %1190 = vrot.lane.b32.xlu0 %v1034, 120
          %v1191 = vpop.permute.xlu0 %1190
          %1192 = vrot.lane.b32.xlu0 %v1035, 120
          %v1193 = vpop.permute.xlu0 %1192
          %1194 = vrot.lane.b32.xlu0 %v1036, 120
          %v1195 = vpop.permute.xlu0 %1194
          %1196 = vrot.lane.b32.xlu0 %v1037, 120
          %v1197 = vpop.permute.xlu0 %1196
          %1198 = vrot.lane.b32.xlu0 %v1038, 120
          %v1199 = vpop.permute.xlu0 %1198
          %1200 = vrot.lane.b32.xlu0 %v1039, 120
          %v1201 = vpop.permute.xlu0 %1200
          %s1218 = scalar_lea.vmem [#allocation3], 64
          %1219 = vst.msk [vmem:[%s1218] sm:$0xf] %vm1040, %v1171
          %1220 = vst.msk [vmem:[%s1218 + $0x4] sm:$0xf] %vm1040, %v1173
          %1221 = vst.msk [vmem:[%s1218 + $0x8] sm:$0xf] %vm1040, %v1175
          %1222 = vst.msk [vmem:[%s1218 + $0xc] sm:$0xf] %vm1040, %v1177
          %1223 = vst.msk [vmem:[%s1218 + $0x10] sm:$0xf] %vm1040, %v1179
          %1224 = vst.msk [vmem:[%s1218 + $0x14] sm:$0xf] %vm1040, %v1181
          %1225 = vst.msk [vmem:[%s1218 + $0x18] sm:$0xf] %vm1040, %v1183
          %1226 = vst.msk [vmem:[%s1218 + $0x1c] sm:$0xf] %vm1040, %v1185
          %1227 = vst.msk [vmem:[%s1218 + $0x20] sm:$0xf] %vm1040, %v1187
          %1228 = vst.msk [vmem:[%s1218 + $0x24] sm:$0xf] %vm1040, %v1189
          %1229 = vst.msk [vmem:[%s1218 + $0x28] sm:$0xf] %vm1040, %v1191
          %1230 = vst.msk [vmem:[%s1218 + $0x2c] sm:$0xf] %vm1040, %v1193
          %1231 = vst.msk [vmem:[%s1218 + $0x30] sm:$0xf] %vm1040, %v1195
          %1232 = vst.msk [vmem:[%s1218 + $0x34] sm:$0xf] %vm1040, %v1197
          %1233 = vst.msk [vmem:[%s1218 + $0x38] sm:$0xf] %vm1040, %v1199
          %1234 = vst.msk [vmem:[%s1218 + $0x3c] sm:$0xf] %vm1040, %v1201
          %1235 = vrot.lane.b32.xlu0 %v1008, 112
          %v1236 = vpop.permute.xlu0 %1235
          %1237 = vrot.lane.b32.xlu0 %v1009, 112
          %v1238 = vpop.permute.xlu0 %1237
          %1239 = vrot.lane.b32.xlu0 %v1010, 112
          %v1240 = vpop.permute.xlu0 %1239
          %1241 = vrot.lane.b32.xlu0 %v1011, 112
          %v1242 = vpop.permute.xlu0 %1241
          %1243 = vrot.lane.b32.xlu0 %v1012, 112
          %v1244 = vpop.permute.xlu0 %1243
          %1245 = vrot.lane.b32.xlu0 %v1013, 112
          %v1246 = vpop.permute.xlu0 %1245
          %1247 = vrot.lane.b32.xlu0 %v1014, 112
          %v1248 = vpop.permute.xlu0 %1247
          %1249 = vrot.lane.b32.xlu0 %v1015, 112
          %v1250 = vpop.permute.xlu0 %1249
          %1251 = vrot.lane.b32.xlu0 %v1016, 112
          %v1252 = vpop.permute.xlu0 %1251
          %1253 = vrot.lane.b32.xlu0 %v1017, 112
          %v1254 = vpop.permute.xlu0 %1253
          %1255 = vrot.lane.b32.xlu0 %v1018, 112
          %v1256 = vpop.permute.xlu0 %1255
          %1257 = vrot.lane.b32.xlu0 %v1019, 112
          %v1258 = vpop.permute.xlu0 %1257
          %1259 = vrot.lane.b32.xlu0 %v1020, 112
          %v1260 = vpop.permute.xlu0 %1259
          %1261 = vrot.lane.b32.xlu0 %v1021, 112
          %v1262 = vpop.permute.xlu0 %1261
          %1263 = vrot.lane.b32.xlu0 %v1022, 112
          %v1264 = vpop.permute.xlu0 %1263
          %1265 = vrot.lane.b32.xlu0 %v1023, 112
          %v1266 = vpop.permute.xlu0 %1265
          %s1283 = scalar_lea.vmem [#allocation2], 128
          %1284 = vst.msk [vmem:[%s1283] sm:$0xf] %vm1040, %v1236
          %1285 = vst.msk [vmem:[%s1283 + $0x4] sm:$0xf] %vm1040, %v1238
          %1286 = vst.msk [vmem:[%s1283 + $0x8] sm:$0xf] %vm1040, %v1240
          %1287 = vst.msk [vmem:[%s1283 + $0xc] sm:$0xf] %vm1040, %v1242
          %1288 = vst.msk [vmem:[%s1283 + $0x10] sm:$0xf] %vm1040, %v1244
          %1289 = vst.msk [vmem:[%s1283 + $0x14] sm:$0xf] %vm1040, %v1246
          %1290 = vst.msk [vmem:[%s1283 + $0x18] sm:$0xf] %vm1040, %v1248
          %1291 = vst.msk [vmem:[%s1283 + $0x1c] sm:$0xf] %vm1040, %v1250
          %1292 = vst.msk [vmem:[%s1283 + $0x20] sm:$0xf] %vm1040, %v1252
          %1293 = vst.msk [vmem:[%s1283 + $0x24] sm:$0xf] %vm1040, %v1254
          %1294 = vst.msk [vmem:[%s1283 + $0x28] sm:$0xf] %vm1040, %v1256
          %1295 = vst.msk [vmem:[%s1283 + $0x2c] sm:$0xf] %vm1040, %v1258
          %1296 = vst.msk [vmem:[%s1283 + $0x30] sm:$0xf] %vm1040, %v1260
          %1297 = vst.msk [vmem:[%s1283 + $0x34] sm:$0xf] %vm1040, %v1262
          %1298 = vst.msk [vmem:[%s1283 + $0x38] sm:$0xf] %vm1040, %v1264
          %1299 = vst.msk [vmem:[%s1283 + $0x3c] sm:$0xf] %vm1040, %v1266
          %1300 = vrot.lane.b32.xlu0 %v1024, 112
          %v1301 = vpop.permute.xlu0 %1300
          %1302 = vrot.lane.b32.xlu0 %v1025, 112
          %v1303 = vpop.permute.xlu0 %1302
          %1304 = vrot.lane.b32.xlu0 %v1026, 112
          %v1305 = vpop.permute.xlu0 %1304
          %1306 = vrot.lane.b32.xlu0 %v1027, 112
          %v1307 = vpop.permute.xlu0 %1306
          %1308 = vrot.lane.b32.xlu0 %v1028, 112
          %v1309 = vpop.permute.xlu0 %1308
          %1310 = vrot.lane.b32.xlu0 %v1029, 112
          %v1311 = vpop.permute.xlu0 %1310
          %1312 = vrot.lane.b32.xlu0 %v1030, 112
          %v1313 = vpop.permute.xlu0 %1312
          %1314 = vrot.lane.b32.xlu0 %v1031, 112
          %v1315 = vpop.permute.xlu0 %1314
          %1316 = vrot.lane.b32.xlu0 %v1032, 112
          %v1317 = vpop.permute.xlu0 %1316
          %1318 = vrot.lane.b32.xlu0 %v1033, 112
          %v1319 = vpop.permute.xlu0 %1318
          %1320 = vrot.lane.b32.xlu0 %v1034, 112
          %v1321 = vpop.permute.xlu0 %1320
          %1322 = vrot.lane.b32.xlu0 %v1035, 112
          %v1323 = vpop.permute.xlu0 %1322
          %1324 = vrot.lane.b32.xlu0 %v1036, 112
          %v1325 = vpop.permute.xlu0 %1324
          %1326 = vrot.lane.b32.xlu0 %v1037, 112
          %v1327 = vpop.permute.xlu0 %1326
          %1328 = vrot.lane.b32.xlu0 %v1038, 112
          %v1329 = vpop.permute.xlu0 %1328
          %1330 = vrot.lane.b32.xlu0 %v1039, 112
          %v1331 = vpop.permute.xlu0 %1330
          %s1348 = scalar_lea.vmem [#allocation3], 128
          %1349 = vst.msk [vmem:[%s1348] sm:$0xf] %vm1040, %v1301
          %1350 = vst.msk [vmem:[%s1348 + $0x4] sm:$0xf] %vm1040, %v1303
          %1351 = vst.msk [vmem:[%s1348 + $0x8] sm:$0xf] %vm1040, %v1305
          %1352 = vst.msk [vmem:[%s1348 + $0xc] sm:$0xf] %vm1040, %v1307
          %1353 = vst.msk [vmem:[%s1348 + $0x10] sm:$0xf] %vm1040, %v1309
          %1354 = vst.msk [vmem:[%s1348 + $0x14] sm:$0xf] %vm1040, %v1311
          %1355 = vst.msk [vmem:[%s1348 + $0x18] sm:$0xf] %vm1040, %v1313
          %1356 = vst.msk [vmem:[%s1348 + $0x1c] sm:$0xf] %vm1040, %v1315
          %1357 = vst.msk [vmem:[%s1348 + $0x20] sm:$0xf] %vm1040, %v1317
          %1358 = vst.msk [vmem:[%s1348 + $0x24] sm:$0xf] %vm1040, %v1319
          %1359 = vst.msk [vmem:[%s1348 + $0x28] sm:$0xf] %vm1040, %v1321
          %1360 = vst.msk [vmem:[%s1348 + $0x2c] sm:$0xf] %vm1040, %v1323
          %1361 = vst.msk [vmem:[%s1348 + $0x30] sm:$0xf] %vm1040, %v1325
          %1362 = vst.msk [vmem:[%s1348 + $0x34] sm:$0xf] %vm1040, %v1327
          %1363 = vst.msk [vmem:[%s1348 + $0x38] sm:$0xf] %vm1040, %v1329
          %1364 = vst.msk [vmem:[%s1348 + $0x3c] sm:$0xf] %vm1040, %v1331
          %1365 = vrot.lane.b32.xlu0 %v1008, 104
          %v1366 = vpop.permute.xlu0 %1365
          %1367 = vrot.lane.b32.xlu0 %v1009, 104
          %v1368 = vpop.permute.xlu0 %1367
          %1369 = vrot.lane.b32.xlu0 %v1010, 104
          %v1370 = vpop.permute.xlu0 %1369
          %1371 = vrot.lane.b32.xlu0 %v1011, 104
          %v1372 = vpop.permute.xlu0 %1371
          %1373 = vrot.lane.b32.xlu0 %v1012, 104
          %v1374 = vpop.permute.xlu0 %1373
          %1375 = vrot.lane.b32.xlu0 %v1013, 104
          %v1376 = vpop.permute.xlu0 %1375
          %1377 = vrot.lane.b32.xlu0 %v1014, 104
          %v1378 = vpop.permute.xlu0 %1377
          %1379 = vrot.lane.b32.xlu0 %v1015, 104
          %v1380 = vpop.permute.xlu0 %1379
          %1381 = vrot.lane.b32.xlu0 %v1016, 104
          %v1382 = vpop.permute.xlu0 %1381
          %1383 = vrot.lane.b32.xlu0 %v1017, 104
          %v1384 = vpop.permute.xlu0 %1383
          %1385 = vrot.lane.b32.xlu0 %v1018, 104
          %v1386 = vpop.permute.xlu0 %1385
          %1387 = vrot.lane.b32.xlu0 %v1019, 104
          %v1388 = vpop.permute.xlu0 %1387
          %1389 = vrot.lane.b32.xlu0 %v1020, 104
          %v1390 = vpop.permute.xlu0 %1389
          %1391 = vrot.lane.b32.xlu0 %v1021, 104
          %v1392 = vpop.permute.xlu0 %1391
          %1393 = vrot.lane.b32.xlu0 %v1022, 104
          %v1394 = vpop.permute.xlu0 %1393
          %1395 = vrot.lane.b32.xlu0 %v1023, 104
          %v1396 = vpop.permute.xlu0 %1395
          %s1413 = scalar_lea.vmem [#allocation2], 192
          %1414 = vst.msk [vmem:[%s1413] sm:$0xf] %vm1040, %v1366
          %1415 = vst.msk [vmem:[%s1413 + $0x4] sm:$0xf] %vm1040, %v1368
          %1416 = vst.msk [vmem:[%s1413 + $0x8] sm:$0xf] %vm1040, %v1370
          %1417 = vst.msk [vmem:[%s1413 + $0xc] sm:$0xf] %vm1040, %v1372
          %1418 = vst.msk [vmem:[%s1413 + $0x10] sm:$0xf] %vm1040, %v1374
          %1419 = vst.msk [vmem:[%s1413 + $0x14] sm:$0xf] %vm1040, %v1376
          %1420 = vst.msk [vmem:[%s1413 + $0x18] sm:$0xf] %vm1040, %v1378
          %1421 = vst.msk [vmem:[%s1413 + $0x1c] sm:$0xf] %vm1040, %v1380
          %1422 = vst.msk [vmem:[%s1413 + $0x20] sm:$0xf] %vm1040, %v1382
          %1423 = vst.msk [vmem:[%s1413 + $0x24] sm:$0xf] %vm1040, %v1384
          %1424 = vst.msk [vmem:[%s1413 + $0x28] sm:$0xf] %vm1040, %v1386
          %1425 = vst.msk [vmem:[%s1413 + $0x2c] sm:$0xf] %vm1040, %v1388
          %1426 = vst.msk [vmem:[%s1413 + $0x30] sm:$0xf] %vm1040, %v1390
          %1427 = vst.msk [vmem:[%s1413 + $0x34] sm:$0xf] %vm1040, %v1392
          %1428 = vst.msk [vmem:[%s1413 + $0x38] sm:$0xf] %vm1040, %v1394
          %1429 = vst.msk [vmem:[%s1413 + $0x3c] sm:$0xf] %vm1040, %v1396
          %1430 = vrot.lane.b32.xlu0 %v1024, 104
          %v1431 = vpop.permute.xlu0 %1430
          %1432 = vrot.lane.b32.xlu0 %v1025, 104
          %v1433 = vpop.permute.xlu0 %1432
          %1434 = vrot.lane.b32.xlu0 %v1026, 104
          %v1435 = vpop.permute.xlu0 %1434
          %1436 = vrot.lane.b32.xlu0 %v1027, 104
          %v1437 = vpop.permute.xlu0 %1436
          %1438 = vrot.lane.b32.xlu0 %v1028, 104
          %v1439 = vpop.permute.xlu0 %1438
          %1440 = vrot.lane.b32.xlu0 %v1029, 104
          %v1441 = vpop.permute.xlu0 %1440
          %1442 = vrot.lane.b32.xlu0 %v1030, 104
          %v1443 = vpop.permute.xlu0 %1442
          %1444 = vrot.lane.b32.xlu0 %v1031, 104
          %v1445 = vpop.permute.xlu0 %1444
          %1446 = vrot.lane.b32.xlu0 %v1032, 104
          %v1447 = vpop.permute.xlu0 %1446
          %1448 = vrot.lane.b32.xlu0 %v1033, 104
          %v1449 = vpop.permute.xlu0 %1448
          %1450 = vrot.lane.b32.xlu0 %v1034, 104
          %v1451 = vpop.permute.xlu0 %1450
          %1452 = vrot.lane.b32.xlu0 %v1035, 104
          %v1453 = vpop.permute.xlu0 %1452
          %1454 = vrot.lane.b32.xlu0 %v1036, 104
          %v1455 = vpop.permute.xlu0 %1454
          %1456 = vrot.lane.b32.xlu0 %v1037, 104
          %v1457 = vpop.permute.xlu0 %1456
          %1458 = vrot.lane.b32.xlu0 %v1038, 104
          %v1459 = vpop.permute.xlu0 %1458
          %1460 = vrot.lane.b32.xlu0 %v1039, 104
          %v1461 = vpop.permute.xlu0 %1460
          %s1478 = scalar_lea.vmem [#allocation3], 192
          %1479 = vst.msk [vmem:[%s1478] sm:$0xf] %vm1040, %v1431
          %1480 = vst.msk [vmem:[%s1478 + $0x4] sm:$0xf] %vm1040, %v1433
          %1481 = vst.msk [vmem:[%s1478 + $0x8] sm:$0xf] %vm1040, %v1435
          %1482 = vst.msk [vmem:[%s1478 + $0xc] sm:$0xf] %vm1040, %v1437
          %1483 = vst.msk [vmem:[%s1478 + $0x10] sm:$0xf] %vm1040, %v1439
          %1484 = vst.msk [vmem:[%s1478 + $0x14] sm:$0xf] %vm1040, %v1441
          %1485 = vst.msk [vmem:[%s1478 + $0x18] sm:$0xf] %vm1040, %v1443
          %1486 = vst.msk [vmem:[%s1478 + $0x1c] sm:$0xf] %vm1040, %v1445
          %1487 = vst.msk [vmem:[%s1478 + $0x20] sm:$0xf] %vm1040, %v1447
          %1488 = vst.msk [vmem:[%s1478 + $0x24] sm:$0xf] %vm1040, %v1449
          %1489 = vst.msk [vmem:[%s1478 + $0x28] sm:$0xf] %vm1040, %v1451
          %1490 = vst.msk [vmem:[%s1478 + $0x2c] sm:$0xf] %vm1040, %v1453
          %1491 = vst.msk [vmem:[%s1478 + $0x30] sm:$0xf] %vm1040, %v1455
          %1492 = vst.msk [vmem:[%s1478 + $0x34] sm:$0xf] %vm1040, %v1457
          %1493 = vst.msk [vmem:[%s1478 + $0x38] sm:$0xf] %vm1040, %v1459
          %1494 = vst.msk [vmem:[%s1478 + $0x3c] sm:$0xf] %vm1040, %v1461
        $region76: #{tpu_custom_call.1} parent=71 // pred_fallthru
          _
        %v1495 = vld [vmem:[%s589] sm:$0xf]
        %v1496 = vld [vmem:[%s589 + $0x4] sm:$0xf]
        %v1497 = vld [vmem:[%s5] sm:$0xf]
        %v1498 = vld [vmem:[%s5 + $0x4] sm:$0xf]
        %v1499 = vld [vmem:[%s5 + $0x8] sm:$0xf]
        %v1500 = vld [vmem:[%s5 + $0xc] sm:$0xf]
        %v1501 = vld [vmem:[%s6] sm:$0x1]
        %v1503 = vperm.slane %v1501, 0
        %v1507 = vunpack.c.l.b16 %v1495
        %v1508 = vunpack.c.l.b16 %v1496
        %v1509 = vpack.c.b16 %v1508, %v1507
        %v1514 = vunpack.c.l.b16 %v1497
        %v1515 = vunpack.c.l.b16 %v1498
        %v1516 = vunpack.c.l.b16 %v1499
        %v1517 = vunpack.c.l.b16 %v1500
        %v1518 = vpack.c.b16 %v1515, %v1514
        %v1519 = vpack.c.b16 %v1517, %v1516
        %vm1522 = vcmask 261120
        %v1524 = vsel %vm1522, %v1509, 0
        %1526 = vmatpush.bf16.msra.mxu0 0
        %1527 = vmatpush.bf16.msra.mxu0 0
        %1528 = vmatpush.bf16.msra.mxu0 0
        %1529 = vmatpush.bf16.msra.mxu0 0
        %1530 = vmatpush.bf16.msra.mxu0 0
        %1531 = vmatpush.bf16.msra.mxu0 0
        %1532 = vmatpush.bf16.msra.mxu0 %v1519
        %1533 = vmatpush.bf16.msra.mxu0 %v1518
        %1534 = vmatmul.bf16.gmra.mxu0 %v1524
        %v1535 = vpop.f32.mrf.mxu0
        %v1536 = vadd.f32 %v1503, %v1535
        %v1537 = vpop.f32.mrf.mxu0
        %v1538 = vadd.f32 %v1503, %v1537
        %1539 = vdwg.mxu0
        %v1540 = vpack.c.bf16 %v1536, %v1536
        %v1541 = vpack.c.bf16 %v1538, %v1538
        %1544 = vrot.lane.b32.xlu0 %v1540, 120
        %v1545 = vpop.permute.xlu0 %1544
        %1546 = vrot.lane.b32.xlu0 %v1541, 120
        %v1547 = vpop.permute.xlu0 %1546
        %1548 = vrot.lane.b32.xlu0 %v1540, 112
        %v1549 = vpop.permute.xlu0 %1548
        %1550 = vrot.lane.b32.xlu0 %v1541, 112
        %v1551 = vpop.permute.xlu0 %1550
        %1552 = vrot.lane.b32.xlu0 %v1540, 104
        %v1553 = vpop.permute.xlu0 %1552
        %1554 = vrot.lane.b32.xlu0 %v1541, 104
        %v1555 = vpop.permute.xlu0 %1554
        %v1556 = vld [vmem:[#allocation2] sm:$0xf]
        %v1557 = vld [vmem:[#allocation2 + $0x4] sm:$0xf]
        %v1558 = vld [vmem:[#allocation2 + $0x8] sm:$0xf]
        %v1559 = vld [vmem:[#allocation2 + $0xc] sm:$0xf]
        %v1560 = vld [vmem:[#allocation2 + $0x10] sm:$0xf]
        %v1561 = vld [vmem:[#allocation2 + $0x14] sm:$0xf]
        %v1562 = vld [vmem:[#allocation2 + $0x18] sm:$0xf]
        %v1563 = vld [vmem:[#allocation2 + $0x1c] sm:$0xf]
        %v1564 = vld [vmem:[#allocation2 + $0x20] sm:$0xf]
        %v1565 = vld [vmem:[#allocation2 + $0x24] sm:$0xf]
        %v1566 = vld [vmem:[#allocation2 + $0x28] sm:$0xf]
        %v1567 = vld [vmem:[#allocation2 + $0x2c] sm:$0xf]
        %v1568 = vld [vmem:[#allocation2 + $0x30] sm:$0xf]
        %v1569 = vld [vmem:[#allocation2 + $0x34] sm:$0xf]
        %v1570 = vld [vmem:[#allocation2 + $0x38] sm:$0xf]
        %v1571 = vld [vmem:[#allocation2 + $0x3c] sm:$0xf]
        %v1572 = vld [vmem:[#allocation2 + $0x40] sm:$0xf]
        %v1573 = vld [vmem:[#allocation2 + $0x44] sm:$0xf]
        %v1574 = vld [vmem:[#allocation2 + $0x48] sm:$0xf]
        %v1575 = vld [vmem:[#allocation2 + $0x4c] sm:$0xf]
        %v1576 = vld [vmem:[#allocation2 + $0x50] sm:$0xf]
        %v1577 = vld [vmem:[#allocation2 + $0x54] sm:$0xf]
        %v1578 = vld [vmem:[#allocation2 + $0x58] sm:$0xf]
        %v1579 = vld [vmem:[#allocation2 + $0x5c] sm:$0xf]
        %v1580 = vld [vmem:[#allocation2 + $0x60] sm:$0xf]
        %v1581 = vld [vmem:[#allocation2 + $0x64] sm:$0xf]
        %v1582 = vld [vmem:[#allocation2 + $0x68] sm:$0xf]
        %v1583 = vld [vmem:[#allocation2 + $0x6c] sm:$0xf]
        %v1584 = vld [vmem:[#allocation2 + $0x70] sm:$0xf]
        %v1585 = vld [vmem:[#allocation2 + $0x74] sm:$0xf]
        %v1586 = vld [vmem:[#allocation2 + $0x78] sm:$0xf]
        %v1587 = vld [vmem:[#allocation2 + $0x7c] sm:$0xf]
        %v1588 = vld [vmem:[#allocation2 + $0x80] sm:$0xf]
        %v1589 = vld [vmem:[#allocation2 + $0x84] sm:$0xf]
        %v1590 = vld [vmem:[#allocation2 + $0x88] sm:$0xf]
        %v1591 = vld [vmem:[#allocation2 + $0x8c] sm:$0xf]
        %v1592 = vld [vmem:[#allocation2 + $0x90] sm:$0xf]
        %v1593 = vld [vmem:[#allocation2 + $0x94] sm:$0xf]
        %v1594 = vld [vmem:[#allocation2 + $0x98] sm:$0xf]
        %v1595 = vld [vmem:[#allocation2 + $0x9c] sm:$0xf]
        %v1596 = vld [vmem:[#allocation2 + $0xa0] sm:$0xf]
        %v1597 = vld [vmem:[#allocation2 + $0xa4] sm:$0xf]
        %v1598 = vld [vmem:[#allocation2 + $0xa8] sm:$0xf]
        %v1599 = vld [vmem:[#allocation2 + $0xac] sm:$0xf]
        %v1600 = vld [vmem:[#allocation2 + $0xb0] sm:$0xf]
        %v1601 = vld [vmem:[#allocation2 + $0xb4] sm:$0xf]
        %v1602 = vld [vmem:[#allocation2 + $0xb8] sm:$0xf]
        %v1603 = vld [vmem:[#allocation2 + $0xbc] sm:$0xf]
        %v1604 = vld [vmem:[#allocation2 + $0xc0] sm:$0xf]
        %v1605 = vld [vmem:[#allocation2 + $0xc4] sm:$0xf]
        %v1606 = vld [vmem:[#allocation2 + $0xc8] sm:$0xf]
        %v1607 = vld [vmem:[#allocation2 + $0xcc] sm:$0xf]
        %v1608 = vld [vmem:[#allocation2 + $0xd0] sm:$0xf]
        %v1609 = vld [vmem:[#allocation2 + $0xd4] sm:$0xf]
        %v1610 = vld [vmem:[#allocation2 + $0xd8] sm:$0xf]
        %v1611 = vld [vmem:[#allocation2 + $0xdc] sm:$0xf]
        %v1612 = vld [vmem:[#allocation2 + $0xe0] sm:$0xf]
        %v1613 = vld [vmem:[#allocation2 + $0xe4] sm:$0xf]
        %v1614 = vld [vmem:[#allocation2 + $0xe8] sm:$0xf]
        %v1615 = vld [vmem:[#allocation2 + $0xec] sm:$0xf]
        %v1616 = vld [vmem:[#allocation2 + $0xf0] sm:$0xf]
        %v1617 = vld [vmem:[#allocation2 + $0xf4] sm:$0xf]
        %v1618 = vld [vmem:[#allocation2 + $0xf8] sm:$0xf]
        %v1619 = vld [vmem:[#allocation2 + $0xfc] sm:$0xf]
        %v1620 = vld [vmem:[#allocation3] sm:$0xf]
        %v1621 = vld [vmem:[#allocation3 + $0x4] sm:$0xf]
        %v1622 = vld [vmem:[#allocation3 + $0x8] sm:$0xf]
        %v1623 = vld [vmem:[#allocation3 + $0xc] sm:$0xf]
        %v1624 = vld [vmem:[#allocation3 + $0x10] sm:$0xf]
        %v1625 = vld [vmem:[#allocation3 + $0x14] sm:$0xf]
        %v1626 = vld [vmem:[#allocation3 + $0x18] sm:$0xf]
        %v1627 = vld [vmem:[#allocation3 + $0x1c] sm:$0xf]
        %v1628 = vld [vmem:[#allocation3 + $0x20] sm:$0xf]
        %v1629 = vld [vmem:[#allocation3 + $0x24] sm:$0xf]
        %v1630 = vld [vmem:[#allocation3 + $0x28] sm:$0xf]
        %v1631 = vld [vmem:[#allocation3 + $0x2c] sm:$0xf]
        %v1632 = vld [vmem:[#allocation3 + $0x30] sm:$0xf]
        %v1633 = vld [vmem:[#allocation3 + $0x34] sm:$0xf]
        %v1634 = vld [vmem:[#allocation3 + $0x38] sm:$0xf]
        %v1635 = vld [vmem:[#allocation3 + $0x3c] sm:$0xf]
        %v1636 = vld [vmem:[#allocation3 + $0x40] sm:$0xf]
        %v1637 = vld [vmem:[#allocation3 + $0x44] sm:$0xf]
        %v1638 = vld [vmem:[#allocation3 + $0x48] sm:$0xf]
        %v1639 = vld [vmem:[#allocation3 + $0x4c] sm:$0xf]
        %v1640 = vld [vmem:[#allocation3 + $0x50] sm:$0xf]
        %v1641 = vld [vmem:[#allocation3 + $0x54] sm:$0xf]
        %v1642 = vld [vmem:[#allocation3 + $0x58] sm:$0xf]
        %v1643 = vld [vmem:[#allocation3 + $0x5c] sm:$0xf]
        %v1644 = vld [vmem:[#allocation3 + $0x60] sm:$0xf]
        %v1645 = vld [vmem:[#allocation3 + $0x64] sm:$0xf]
        %v1646 = vld [vmem:[#allocation3 + $0x68] sm:$0xf]
        %v1647 = vld [vmem:[#allocation3 + $0x6c] sm:$0xf]
        %v1648 = vld [vmem:[#allocation3 + $0x70] sm:$0xf]
        %v1649 = vld [vmem:[#allocation3 + $0x74] sm:$0xf]
        %v1650 = vld [vmem:[#allocation3 + $0x78] sm:$0xf]
        %v1651 = vld [vmem:[#allocation3 + $0x7c] sm:$0xf]
        %v1652 = vld [vmem:[#allocation3 + $0x80] sm:$0xf]
        %v1653 = vld [vmem:[#allocation3 + $0x84] sm:$0xf]
        %v1654 = vld [vmem:[#allocation3 + $0x88] sm:$0xf]
        %v1655 = vld [vmem:[#allocation3 + $0x8c] sm:$0xf]
        %v1656 = vld [vmem:[#allocation3 + $0x90] sm:$0xf]
        %v1657 = vld [vmem:[#allocation3 + $0x94] sm:$0xf]
        %v1658 = vld [vmem:[#allocation3 + $0x98] sm:$0xf]
        %v1659 = vld [vmem:[#allocation3 + $0x9c] sm:$0xf]
        %v1660 = vld [vmem:[#allocation3 + $0xa0] sm:$0xf]
        %v1661 = vld [vmem:[#allocation3 + $0xa4] sm:$0xf]
        %v1662 = vld [vmem:[#allocation3 + $0xa8] sm:$0xf]
        %v1663 = vld [vmem:[#allocation3 + $0xac] sm:$0xf]
        %v1664 = vld [vmem:[#allocation3 + $0xb0] sm:$0xf]
        %v1665 = vld [vmem:[#allocation3 + $0xb4] sm:$0xf]
        %v1666 = vld [vmem:[#allocation3 + $0xb8] sm:$0xf]
        %v1667 = vld [vmem:[#allocation3 + $0xbc] sm:$0xf]
        %v1668 = vld [vmem:[#allocation3 + $0xc0] sm:$0xf]
        %v1669 = vld [vmem:[#allocation3 + $0xc4] sm:$0xf]
        %v1670 = vld [vmem:[#allocation3 + $0xc8] sm:$0xf]
        %v1671 = vld [vmem:[#allocation3 + $0xcc] sm:$0xf]
        %v1672 = vld [vmem:[#allocation3 + $0xd0] sm:$0xf]
        %v1673 = vld [vmem:[#allocation3 + $0xd4] sm:$0xf]
        %v1674 = vld [vmem:[#allocation3 + $0xd8] sm:$0xf]
        %v1675 = vld [vmem:[#allocation3 + $0xdc] sm:$0xf]
        %v1676 = vld [vmem:[#allocation3 + $0xe0] sm:$0xf]
        %v1677 = vld [vmem:[#allocation3 + $0xe4] sm:$0xf]
        %v1678 = vld [vmem:[#allocation3 + $0xe8] sm:$0xf]
        %v1679 = vld [vmem:[#allocation3 + $0xec] sm:$0xf]
        %v1680 = vld [vmem:[#allocation3 + $0xf0] sm:$0xf]
        %v1681 = vld [vmem:[#allocation3 + $0xf4] sm:$0xf]
        %v1682 = vld [vmem:[#allocation3 + $0xf8] sm:$0xf]
        %v1683 = vld [vmem:[#allocation3 + $0xfc] sm:$0xf]
        %v1684 = vld [vmem:[%s619] sm:$0xf]
        %v1685 = vld [vmem:[%s619 + $0x4] sm:$0xf]
        %v1686 = vunpack.c.l.bf16 %v1684
        %v1687 = vunpack.c.l.bf16 %v1685
        %v1688 = vunpack.c.l.b16 %v1540
        %v1689 = vunpack.c.l.b16 %v1541
        %v1690 = vpack.c.b16 %v1689, %v1688
        %v1707 = vunpack.c.l.b16 %v1556
        %v1708 = vunpack.c.l.b16 %v1557
        %v1709 = vunpack.c.l.b16 %v1558
        %v1710 = vunpack.c.l.b16 %v1559
        %v1711 = vunpack.c.l.b16 %v1560
        %v1712 = vunpack.c.l.b16 %v1561
        %v1713 = vunpack.c.l.b16 %v1562
        %v1714 = vunpack.c.l.b16 %v1563
        %v1715 = vunpack.c.l.b16 %v1564
        %v1716 = vunpack.c.l.b16 %v1565
        %v1717 = vunpack.c.l.b16 %v1566
        %v1718 = vunpack.c.l.b16 %v1567
        %v1719 = vunpack.c.l.b16 %v1568
        %v1720 = vunpack.c.l.b16 %v1569
        %v1721 = vunpack.c.l.b16 %v1570
        %v1722 = vunpack.c.l.b16 %v1571
        %v1723 = vpack.c.b16 %v1708, %v1707
        %v1724 = vpack.c.b16 %v1710, %v1709
        %v1725 = vpack.c.b16 %v1712, %v1711
        %v1726 = vpack.c.b16 %v1714, %v1713
        %v1727 = vpack.c.b16 %v1716, %v1715
        %v1728 = vpack.c.b16 %v1718, %v1717
        %v1729 = vpack.c.b16 %v1720, %v1719
        %v1730 = vpack.c.b16 %v1722, %v1721
        %vm1731 = vcmask 64512
        %v1733 = vsel %vm1731, %v1690, 0
        %v1736 = vsel %vm1731, %v1723, 0
        %v1739 = vsel %vm1731, %v1724, 0
        %v1742 = vsel %vm1731, %v1725, 0
        %v1745 = vsel %vm1731, %v1726, 0
        %v1748 = vsel %vm1731, %v1727, 0
        %v1751 = vsel %vm1731, %v1728, 0
        %v1754 = vsel %vm1731, %v1729, 0
        %v1757 = vsel %vm1731, %v1730, 0
        %1759 = vmatpush.bf16.xpose.msra.mxu0 %v1757
        %1760 = vmatpush.bf16.xpose.msra.mxu0 %v1754
        %1761 = vmatpush.bf16.xpose.msra.mxu0 %v1751
        %1762 = vmatpush.bf16.xpose.msra.mxu0 %v1748
        %1763 = vmatpush.bf16.xpose.msra.mxu0 %v1745
        %1764 = vmatpush.bf16.xpose.msra.mxu0 %v1742
        %1765 = vmatpush.bf16.xpose.msra.mxu0 %v1739
        %1766 = vmatpush.bf16.xpose.msra.mxu0 %v1736
        %1767 = vmatmul.bf16.gmra.mxu0 %v1733
        %v1768 = vpop.f32.mrf.mxu0
        %v1769 = vadd.f32 %v1686, %v1768
        %v1770 = vpop.f32.mrf.mxu0
        %v1771 = vadd.f32 %v1687, %v1770
        %1772 = vdwg.mxu0
        %v1773 = vunpack.c.l.b16 %v1545
        %v1774 = vunpack.c.l.b16 %v1547
        %v1775 = vpack.c.b16 %v1774, %v1773
        %v1792 = vunpack.c.l.b16 %v1572
        %v1793 = vunpack.c.l.b16 %v1573
        %v1794 = vunpack.c.l.b16 %v1574
        %v1795 = vunpack.c.l.b16 %v1575
        %v1796 = vunpack.c.l.b16 %v1576
        %v1797 = vunpack.c.l.b16 %v1577
        %v1798 = vunpack.c.l.b16 %v1578
        %v1799 = vunpack.c.l.b16 %v1579
        %v1800 = vunpack.c.l.b16 %v1580
        %v1801 = vunpack.c.l.b16 %v1581
        %v1802 = vunpack.c.l.b16 %v1582
        %v1803 = vunpack.c.l.b16 %v1583
        %v1804 = vunpack.c.l.b16 %v1584
        %v1805 = vunpack.c.l.b16 %v1585
        %v1806 = vunpack.c.l.b16 %v1586
        %v1807 = vunpack.c.l.b16 %v1587
        %v1808 = vpack.c.b16 %v1793, %v1792
        %v1809 = vpack.c.b16 %v1795, %v1794
        %v1810 = vpack.c.b16 %v1797, %v1796
        %v1811 = vpack.c.b16 %v1799, %v1798
        %v1812 = vpack.c.b16 %v1801, %v1800
        %v1813 = vpack.c.b16 %v1803, %v1802
        %v1814 = vpack.c.b16 %v1805, %v1804
        %v1815 = vpack.c.b16 %v1807, %v1806
        %v1817 = vsel %vm1731, %v1775, 0
        %v1820 = vsel %vm1731, %v1808, 0
        %v1823 = vsel %vm1731, %v1809, 0
        %v1826 = vsel %vm1731, %v1810, 0
        %v1829 = vsel %vm1731, %v1811, 0
        %v1832 = vsel %vm1731, %v1812, 0
        %v1835 = vsel %vm1731, %v1813, 0
        %v1838 = vsel %vm1731, %v1814, 0
        %v1841 = vsel %vm1731, %v1815, 0
        %1843 = vmatpush.bf16.xpose.msra.mxu0 %v1841
        %1844 = vmatpush.bf16.xpose.msra.mxu0 %v1838
        %1845 = vmatpush.bf16.xpose.msra.mxu0 %v1835
        %1846 = vmatpush.bf16.xpose.msra.mxu0 %v1832
        %1847 = vmatpush.bf16.xpose.msra.mxu0 %v1829
        %1848 = vmatpush.bf16.xpose.msra.mxu0 %v1826
        %1849 = vmatpush.bf16.xpose.msra.mxu0 %v1823
        %1850 = vmatpush.bf16.xpose.msra.mxu0 %v1820
        %1851 = vmatmul.bf16.gmra.mxu0 %v1817
        %v1852 = vpop.f32.mrf.mxu0
        %v1853 = vadd.f32 %v1686, %v1852
        %v1854 = vpop.f32.mrf.mxu0
        %v1855 = vadd.f32 %v1687, %v1854
        %1856 = vdwg.mxu0
        %v1857 = vunpack.c.l.b16 %v1549
        %v1858 = vunpack.c.l.b16 %v1551
        %v1859 = vpack.c.b16 %v1858, %v1857
        %v1876 = vunpack.c.l.b16 %v1588
        %v1877 = vunpack.c.l.b16 %v1589
        %v1878 = vunpack.c.l.b16 %v1590
        %v1879 = vunpack.c.l.b16 %v1591
        %v1880 = vunpack.c.l.b16 %v1592
        %v1881 = vunpack.c.l.b16 %v1593
        %v1882 = vunpack.c.l.b16 %v1594
        %v1883 = vunpack.c.l.b16 %v1595
        %v1884 = vunpack.c.l.b16 %v1596
        %v1885 = vunpack.c.l.b16 %v1597
        %v1886 = vunpack.c.l.b16 %v1598
        %v1887 = vunpack.c.l.b16 %v1599
        %v1888 = vunpack.c.l.b16 %v1600
        %v1889 = vunpack.c.l.b16 %v1601
        %v1890 = vunpack.c.l.b16 %v1602
        %v1891 = vunpack.c.l.b16 %v1603
        %v1892 = vpack.c.b16 %v1877, %v1876
        %v1893 = vpack.c.b16 %v1879, %v1878
        %v1894 = vpack.c.b16 %v1881, %v1880
        %v1895 = vpack.c.b16 %v1883, %v1882
        %v1896 = vpack.c.b16 %v1885, %v1884
        %v1897 = vpack.c.b16 %v1887, %v1886
        %v1898 = vpack.c.b16 %v1889, %v1888
        %v1899 = vpack.c.b16 %v1891, %v1890
        %v1901 = vsel %vm1731, %v1859, 0
        %v1904 = vsel %vm1731, %v1892, 0
        %v1907 = vsel %vm1731, %v1893, 0
        %v1910 = vsel %vm1731, %v1894, 0
        %v1913 = vsel %vm1731, %v1895, 0
        %v1916 = vsel %vm1731, %v1896, 0
        %v1919 = vsel %vm1731, %v1897, 0
        %v1922 = vsel %vm1731, %v1898, 0
        %v1925 = vsel %vm1731, %v1899, 0
        %1927 = vmatpush.bf16.xpose.msra.mxu0 %v1925
        %1928 = vmatpush.bf16.xpose.msra.mxu0 %v1922
        %1929 = vmatpush.bf16.xpose.msra.mxu0 %v1919
        %1930 = vmatpush.bf16.xpose.msra.mxu0 %v1916
        %1931 = vmatpush.bf16.xpose.msra.mxu0 %v1913
        %1932 = vmatpush.bf16.xpose.msra.mxu0 %v1910
        %1933 = vmatpush.bf16.xpose.msra.mxu0 %v1907
        %1934 = vmatpush.bf16.xpose.msra.mxu0 %v1904
        %1935 = vmatmul.bf16.gmra.mxu0 %v1901
        %v1936 = vpop.f32.mrf.mxu0
        %v1937 = vadd.f32 %v1686, %v1936
        %v1938 = vpop.f32.mrf.mxu0
        %v1939 = vadd.f32 %v1687, %v1938
        %1940 = vdwg.mxu0
        %v1941 = vunpack.c.l.b16 %v1553
        %v1942 = vunpack.c.l.b16 %v1555
        %v1943 = vpack.c.b16 %v1942, %v1941
        %v1960 = vunpack.c.l.b16 %v1604
        %v1961 = vunpack.c.l.b16 %v1605
        %v1962 = vunpack.c.l.b16 %v1606
        %v1963 = vunpack.c.l.b16 %v1607
        %v1964 = vunpack.c.l.b16 %v1608
        %v1965 = vunpack.c.l.b16 %v1609
        %v1966 = vunpack.c.l.b16 %v1610
        %v1967 = vunpack.c.l.b16 %v1611
        %v1968 = vunpack.c.l.b16 %v1612
        %v1969 = vunpack.c.l.b16 %v1613
        %v1970 = vunpack.c.l.b16 %v1614
        %v1971 = vunpack.c.l.b16 %v1615
        %v1972 = vunpack.c.l.b16 %v1616
        %v1973 = vunpack.c.l.b16 %v1617
        %v1974 = vunpack.c.l.b16 %v1618
        %v1975 = vunpack.c.l.b16 %v1619
        %v1976 = vpack.c.b16 %v1961, %v1960
        %v1977 = vpack.c.b16 %v1963, %v1962
        %v1978 = vpack.c.b16 %v1965, %v1964
        %v1979 = vpack.c.b16 %v1967, %v1966
        %v1980 = vpack.c.b16 %v1969, %v1968
        %v1981 = vpack.c.b16 %v1971, %v1970
        %v1982 = vpack.c.b16 %v1973, %v1972
        %v1983 = vpack.c.b16 %v1975, %v1974
        %v1985 = vsel %vm1731, %v1943, 0
        %v1988 = vsel %vm1731, %v1976, 0
        %v1991 = vsel %vm1731, %v1977, 0
        %v1994 = vsel %vm1731, %v1978, 0
        %v1997 = vsel %vm1731, %v1979, 0
        %v2000 = vsel %vm1731, %v1980, 0
        %v2003 = vsel %vm1731, %v1981, 0
        %v2006 = vsel %vm1731, %v1982, 0
        %v2009 = vsel %vm1731, %v1983, 0
        %2011 = vmatpush.bf16.xpose.msra.mxu0 %v2009
        %2012 = vmatpush.bf16.xpose.msra.mxu0 %v2006
        %2013 = vmatpush.bf16.xpose.msra.mxu0 %v2003
        %2014 = vmatpush.bf16.xpose.msra.mxu0 %v2000
        %2015 = vmatpush.bf16.xpose.msra.mxu0 %v1997
        %2016 = vmatpush.bf16.xpose.msra.mxu0 %v1994
        %2017 = vmatpush.bf16.xpose.msra.mxu0 %v1991
        %2018 = vmatpush.bf16.xpose.msra.mxu0 %v1988
        %2019 = vmatmul.bf16.gmra.mxu0 %v1985
        %v2020 = vpop.f32.mrf.mxu0
        %v2021 = vadd.f32 %v1686, %v2020
        %v2022 = vpop.f32.mrf.mxu0
        %v2023 = vadd.f32 %v1687, %v2022
        %2024 = vdwg.mxu0
        %2025 = vmax.xlane.f32.xlu0 %v1769
        %v2026 = vpop.xlane.xlu0 %2025
        %2027 = vmax.xlane.f32.xlu0 %v1771
        %v2028 = vpop.xlane.xlu0 %2027
        %2029 = vmax.xlane.f32.xlu0 %v1853
        %v2030 = vpop.xlane.xlu0 %2029
        %2031 = vmax.xlane.f32.xlu0 %v1855
        %v2032 = vpop.xlane.xlu0 %2031
        %2033 = vmax.xlane.f32.xlu0 %v1937
        %v2034 = vpop.xlane.xlu0 %2033
        %2035 = vmax.xlane.f32.xlu0 %v1939
        %v2036 = vpop.xlane.xlu0 %2035
        %2037 = vmax.xlane.f32.xlu0 %v2021
        %v2038 = vpop.xlane.xlu0 %2037
        %2039 = vmax.xlane.f32.xlu0 %v2023
        %v2040 = vpop.xlane.xlu0 %2039
        %v2041 = vsub.f32 %v1769, %v2026
        %v2042 = vsub.f32 %v1771, %v2028
        %v2043 = vsub.f32 %v1853, %v2030
        %v2044 = vsub.f32 %v1855, %v2032
        %v2045 = vsub.f32 %v1937, %v2034
        %v2046 = vsub.f32 %v1939, %v2036
        %v2047 = vsub.f32 %v2021, %v2038
        %v2048 = vsub.f32 %v2023, %v2040
        %v2049 = vmul.f32 %v2041, 1.442695
        %v2050 = vpow.pop %v2049
        %v2051 = vmul.f32 %v2042, 1.442695
        %v2052 = vpow.pop %v2051
        %v2053 = vmul.f32 %v2043, 1.442695
        %v2054 = vpow.pop %v2053
        %v2055 = vmul.f32 %v2044, 1.442695
        %v2056 = vpow.pop %v2055
        %v2057 = vmul.f32 %v2045, 1.442695
        %v2058 = vpow.pop %v2057
        %v2059 = vmul.f32 %v2046, 1.442695
        %v2060 = vpow.pop %v2059
        %v2061 = vmul.f32 %v2047, 1.442695
        %v2062 = vpow.pop %v2061
        %v2063 = vmul.f32 %v2048, 1.442695
        %v2064 = vpow.pop %v2063
        %2065 = vadd.xlane.f32.xlu0 %v2050
        %v2066 = vpop.xlane.xlu0 %2065
        %2067 = vadd.xlane.f32.xlu0 %v2052
        %v2068 = vpop.xlane.xlu0 %2067
        %2069 = vadd.xlane.f32.xlu0 %v2054
        %v2070 = vpop.xlane.xlu0 %2069
        %2071 = vadd.xlane.f32.xlu0 %v2056
        %v2072 = vpop.xlane.xlu0 %2071
        %2073 = vadd.xlane.f32.xlu0 %v2058
        %v2074 = vpop.xlane.xlu0 %2073
        %2075 = vadd.xlane.f32.xlu0 %v2060
        %v2076 = vpop.xlane.xlu0 %2075
        %2077 = vadd.xlane.f32.xlu0 %v2062
        %v2078 = vpop.xlane.xlu0 %2077
        %2079 = vadd.xlane.f32.xlu0 %v2064
        %v2080 = vpop.xlane.xlu0 %2079
        %v2081 = vrcp.pop %v2066
        %v2082 = vmul.f32 %v2066, %v2081
        %v2083 = vsub.f32 1.0, %v2082
        %v2084 = vmul.f32 %v2081, %v2083
        %v2085 = vadd.f32 %v2081, %v2084
        %vm2086 = vweird.f32 %v2066
        %vm2087 = vweird.f32 %v2081
        %vm2088 = vmor %vm2086, %vm2087
        %v2089 = vsel %vm2088, %v2081, %v2085
        %v2090 = vand.u32 2147483647, %v2066
        %vm2091 = vcmp.eq.f32.partialorder %v2090, 8.507059e+37
        %v2092 = vand.u32 %v2066, 2147483648
        %v2093 = vor.u32 1.1754944e-38, %v2092
        %v2094 = vsel %vm2091, %v2093, %v2089
        %v2095 = vmul.f32 %v2050, %v2094
        %v2096 = vrcp.pop %v2068
        %v2097 = vmul.f32 %v2068, %v2096
        %v2098 = vsub.f32 1.0, %v2097
        %v2099 = vmul.f32 %v2096, %v2098
        %v2100 = vadd.f32 %v2096, %v2099
        %vm2101 = vweird.f32 %v2068
        %vm2102 = vweird.f32 %v2096
        %vm2103 = vmor %vm2101, %vm2102
        %v2104 = vsel %vm2103, %v2096, %v2100
        %v2105 = vand.u32 2147483647, %v2068
        %vm2106 = vcmp.eq.f32.partialorder %v2105, 8.507059e+37
        %v2107 = vand.u32 %v2068, 2147483648
        %v2108 = vor.u32 1.1754944e-38, %v2107
        %v2109 = vsel %vm2106, %v2108, %v2104
        %v2110 = vmul.f32 %v2052, %v2109
        %v2111 = vrcp.pop %v2070
        %v2112 = vmul.f32 %v2070, %v2111
        %v2113 = vsub.f32 1.0, %v2112
        %v2114 = vmul.f32 %v2111, %v2113
        %v2115 = vadd.f32 %v2111, %v2114
        %vm2116 = vweird.f32 %v2070
        %vm2117 = vweird.f32 %v2111
        %vm2118 = vmor %vm2116, %vm2117
        %v2119 = vsel %vm2118, %v2111, %v2115
        %v2120 = vand.u32 2147483647, %v2070
        %vm2121 = vcmp.eq.f32.partialorder %v2120, 8.507059e+37
        %v2122 = vand.u32 %v2070, 2147483648
        %v2123 = vor.u32 1.1754944e-38, %v2122
        %v2124 = vsel %vm2121, %v2123, %v2119
        %v2125 = vmul.f32 %v2054, %v2124
        %v2126 = vrcp.pop %v2072
        %v2127 = vmul.f32 %v2072, %v2126
        %v2128 = vsub.f32 1.0, %v2127
        %v2129 = vmul.f32 %v2126, %v2128
        %v2130 = vadd.f32 %v2126, %v2129
        %vm2131 = vweird.f32 %v2072
        %vm2132 = vweird.f32 %v2126
        %vm2133 = vmor %vm2131, %vm2132
        %v2134 = vsel %vm2133, %v2126, %v2130
        %v2135 = vand.u32 2147483647, %v2072
        %vm2136 = vcmp.eq.f32.partialorder %v2135, 8.507059e+37
        %v2137 = vand.u32 %v2072, 2147483648
        %v2138 = vor.u32 1.1754944e-38, %v2137
        %v2139 = vsel %vm2136, %v2138, %v2134
        %v2140 = vmul.f32 %v2056, %v2139
        %v2141 = vrcp.pop %v2074
        %v2142 = vmul.f32 %v2074, %v2141
        %v2143 = vsub.f32 1.0, %v2142
        %v2144 = vmul.f32 %v2141, %v2143
        %v2145 = vadd.f32 %v2141, %v2144
        %vm2146 = vweird.f32 %v2074
        %vm2147 = vweird.f32 %v2141
        %vm2148 = vmor %vm2146, %vm2147
        %v2149 = vsel %vm2148, %v2141, %v2145
        %v2150 = vand.u32 2147483647, %v2074
        %vm2151 = vcmp.eq.f32.partialorder %v2150, 8.507059e+37
        %v2152 = vand.u32 %v2074, 2147483648
        %v2153 = vor.u32 1.1754944e-38, %v2152
        %v2154 = vsel %vm2151, %v2153, %v2149
        %v2155 = vmul.f32 %v2058, %v2154
        %v2156 = vrcp.pop %v2076
        %v2157 = vmul.f32 %v2076, %v2156
        %v2158 = vsub.f32 1.0, %v2157
        %v2159 = vmul.f32 %v2156, %v2158
        %v2160 = vadd.f32 %v2156, %v2159
        %vm2161 = vweird.f32 %v2076
        %vm2162 = vweird.f32 %v2156
        %vm2163 = vmor %vm2161, %vm2162
        %v2164 = vsel %vm2163, %v2156, %v2160
        %v2165 = vand.u32 2147483647, %v2076
        %vm2166 = vcmp.eq.f32.partialorder %v2165, 8.507059e+37
        %v2167 = vand.u32 %v2076, 2147483648
        %v2168 = vor.u32 1.1754944e-38, %v2167
        %v2169 = vsel %vm2166, %v2168, %v2164
        %v2170 = vmul.f32 %v2060, %v2169
        %v2171 = vrcp.pop %v2078
        %v2172 = vmul.f32 %v2078, %v2171
        %v2173 = vsub.f32 1.0, %v2172
        %v2174 = vmul.f32 %v2171, %v2173
        %v2175 = vadd.f32 %v2171, %v2174
        %vm2176 = vweird.f32 %v2078
        %vm2177 = vweird.f32 %v2171
        %vm2178 = vmor %vm2176, %vm2177
        %v2179 = vsel %vm2178, %v2171, %v2175
        %v2180 = vand.u32 2147483647, %v2078
        %vm2181 = vcmp.eq.f32.partialorder %v2180, 8.507059e+37
        %v2182 = vand.u32 %v2078, 2147483648
        %v2183 = vor.u32 1.1754944e-38, %v2182
        %v2184 = vsel %vm2181, %v2183, %v2179
        %v2185 = vmul.f32 %v2062, %v2184
        %v2186 = vrcp.pop %v2080
        %v2187 = vmul.f32 %v2080, %v2186
        %v2188 = vsub.f32 1.0, %v2187
        %v2189 = vmul.f32 %v2186, %v2188
        %v2190 = vadd.f32 %v2186, %v2189
        %vm2191 = vweird.f32 %v2080
        %vm2192 = vweird.f32 %v2186
        %vm2193 = vmor %vm2191, %vm2192
        %v2194 = vsel %vm2193, %v2186, %v2190
        %v2195 = vand.u32 2147483647, %v2080
        %vm2196 = vcmp.eq.f32.partialorder %v2195, 8.507059e+37
        %v2197 = vand.u32 %v2080, 2147483648
        %v2198 = vor.u32 1.1754944e-38, %v2197
        %v2199 = vsel %vm2196, %v2198, %v2194
        %v2200 = vmul.f32 %v2064, %v2199
        %v2201 = vld [vmem:[%s609] sm:$0xff]
        %v2202 = vld [vmem:[%s609 + $0x8] sm:$0xff]
        %vm2203 = vcmp.gt.f32.partialorder %v2201, 0.0
        %vm2204 = vcmp.gt.f32.partialorder %v2202, 0.0
        %v2205 = vsel %vm2203, 1, 0
        %v2206 = vsel %vm2204, 1, 0
        %2207 = vset.pattern.permute.xlu0 0
        %2208 = vperm.xlu0 %2207, %v2205
        %v2209 = vpop.permute.xlu0 %2208
        %2210 = vset.pattern.permute.xlu0 0
        %2211 = vperm.xlu0 %2210, %v2206
        %v2212 = vpop.permute.xlu0 %2211
        %vm2213 = vcmp.eq.s32.totalorder %v2209, 1
        %vm2214 = vcmp.eq.s32.totalorder %v2212, 1
        %v2215 = vsel %vm2213, %v2095, 0.041666668
        %v2216 = vsel %vm2214, %v2110, 0.041666668
        %v2217 = vsel %vm2213, %v2125, 0.041666668
        %v2218 = vsel %vm2214, %v2140, 0.041666668
        %v2219 = vsel %vm2213, %v2155, 0.041666668
        %v2220 = vsel %vm2214, %v2170, 0.041666668
        %v2221 = vsel %vm2213, %v2185, 0.041666668
        %v2222 = vsel %vm2214, %v2200, 0.041666668
        %v2223 = vpack.c.bf16 %v2215, %v2215
        %v2224 = vpack.c.bf16 %v2216, %v2216
        %v2225 = vpack.c.bf16 %v2217, %v2217
        %v2226 = vpack.c.bf16 %v2218, %v2218
        %v2227 = vpack.c.bf16 %v2219, %v2219
        %v2228 = vpack.c.bf16 %v2220, %v2220
        %v2229 = vpack.c.bf16 %v2221, %v2221
        %v2230 = vpack.c.bf16 %v2222, %v2222
        %2231 = vst [vmem:[%s580] sm:$0xf] %v2223
        %2232 = vst [vmem:[%s580 + $0x4] sm:$0xf] %v2224
        %2233 = vst [vmem:[%s580 + $0x8] sm:$0xf] %v2225
        %2234 = vst [vmem:[%s580 + $0xc] sm:$0xf] %v2226
        %2235 = vst [vmem:[%s580 + $0x10] sm:$0xf] %v2227
        %2236 = vst [vmem:[%s580 + $0x14] sm:$0xf] %v2228
        %2237 = vst [vmem:[%s580 + $0x18] sm:$0xf] %v2229
        %2238 = vst [vmem:[%s580 + $0x1c] sm:$0xf] %v2230
        %v2241 = vunpack.c.l.b16 %v2223
        %v2242 = vunpack.c.l.b16 %v2224
        %v2243 = vpack.c.b16 %v2242, %v2241
        %v2261 = vunpack.c.l.b16 %v1620
        %v2262 = vunpack.c.l.b16 %v1621
        %v2263 = vunpack.c.l.b16 %v1622
        %v2264 = vunpack.c.l.b16 %v1623
        %v2265 = vunpack.c.l.b16 %v1624
        %v2266 = vunpack.c.l.b16 %v1625
        %v2267 = vunpack.c.l.b16 %v1626
        %v2268 = vunpack.c.l.b16 %v1627
        %v2269 = vunpack.c.l.b16 %v1628
        %v2270 = vunpack.c.l.b16 %v1629
        %v2271 = vunpack.c.l.b16 %v1630
        %v2272 = vunpack.c.l.b16 %v1631
        %v2273 = vunpack.c.l.b16 %v1632
        %v2274 = vunpack.c.l.b16 %v1633
        %v2275 = vunpack.c.l.b16 %v1634
        %v2276 = vunpack.c.l.b16 %v1635
        %v2277 = vpack.c.b16 %v2262, %v2261
        %v2278 = vpack.c.b16 %v2264, %v2263
        %v2279 = vpack.c.b16 %v2266, %v2265
        %v2280 = vpack.c.b16 %v2268, %v2267
        %v2281 = vpack.c.b16 %v2270, %v2269
        %v2282 = vpack.c.b16 %v2272, %v2271
        %v2283 = vpack.c.b16 %v2274, %v2273
        %v2284 = vpack.c.b16 %v2276, %v2275
        %2293 = vmatpush.bf16.msra.mxu0 %v2284
        %2294 = vmatpush.bf16.msra.mxu0 %v2283
        %2295 = vmatpush.bf16.msra.mxu0 %v2282
        %2296 = vmatpush.bf16.msra.mxu0 %v2281
        %2297 = vmatpush.bf16.msra.mxu0 %v2280
        %2298 = vmatpush.bf16.msra.mxu0 %v2279
        %2299 = vmatpush.bf16.msra.mxu0 %v2278
        %2300 = vmatpush.bf16.msra.mxu0 %v2277
        %2301 = vmatmul.bf16.gmra.mxu0 %v2243
        %v2302 = vpop.f32.mrf.mxu0
        %v2303 = vadd.f32 0.0, %v2302
        %v2304 = vpop.f32.mrf.mxu0
        %v2305 = vadd.f32 0.0, %v2304
        %2306 = vdwg.mxu0
        %v2309 = vunpack.c.l.b16 %v2225
        %v2310 = vunpack.c.l.b16 %v2226
        %v2311 = vpack.c.b16 %v2310, %v2309
        %v2329 = vunpack.c.l.b16 %v1636
        %v2330 = vunpack.c.l.b16 %v1637
        %v2331 = vunpack.c.l.b16 %v1638
        %v2332 = vunpack.c.l.b16 %v1639
        %v2333 = vunpack.c.l.b16 %v1640
        %v2334 = vunpack.c.l.b16 %v1641
        %v2335 = vunpack.c.l.b16 %v1642
        %v2336 = vunpack.c.l.b16 %v1643
        %v2337 = vunpack.c.l.b16 %v1644
        %v2338 = vunpack.c.l.b16 %v1645
        %v2339 = vunpack.c.l.b16 %v1646
        %v2340 = vunpack.c.l.b16 %v1647
        %v2341 = vunpack.c.l.b16 %v1648
        %v2342 = vunpack.c.l.b16 %v1649
        %v2343 = vunpack.c.l.b16 %v1650
        %v2344 = vunpack.c.l.b16 %v1651
        %v2345 = vpack.c.b16 %v2330, %v2329
        %v2346 = vpack.c.b16 %v2332, %v2331
        %v2347 = vpack.c.b16 %v2334, %v2333
        %v2348 = vpack.c.b16 %v2336, %v2335
        %v2349 = vpack.c.b16 %v2338, %v2337
        %v2350 = vpack.c.b16 %v2340, %v2339
        %v2351 = vpack.c.b16 %v2342, %v2341
        %v2352 = vpack.c.b16 %v2344, %v2343
        %2361 = vmatpush.bf16.msra.mxu0 %v2352
        %2362 = vmatpush.bf16.msra.mxu0 %v2351
        %2363 = vmatpush.bf16.msra.mxu0 %v2350
        %2364 = vmatpush.bf16.msra.mxu0 %v2349
        %2365 = vmatpush.bf16.msra.mxu0 %v2348
        %2366 = vmatpush.bf16.msra.mxu0 %v2347
        %2367 = vmatpush.bf16.msra.mxu0 %v2346
        %2368 = vmatpush.bf16.msra.mxu0 %v2345
        %2369 = vmatmul.bf16.gmra.mxu0 %v2311
        %v2370 = vpop.f32.mrf.mxu0
        %v2371 = vadd.f32 0.0, %v2370
        %v2372 = vpop.f32.mrf.mxu0
        %v2373 = vadd.f32 0.0, %v2372
        %2374 = vdwg.mxu0
        %v2377 = vunpack.c.l.b16 %v2227
        %v2378 = vunpack.c.l.b16 %v2228
        %v2379 = vpack.c.b16 %v2378, %v2377
        %v2397 = vunpack.c.l.b16 %v1652
        %v2398 = vunpack.c.l.b16 %v1653
        %v2399 = vunpack.c.l.b16 %v1654
        %v2400 = vunpack.c.l.b16 %v1655
        %v2401 = vunpack.c.l.b16 %v1656
        %v2402 = vunpack.c.l.b16 %v1657
        %v2403 = vunpack.c.l.b16 %v1658
        %v2404 = vunpack.c.l.b16 %v1659
        %v2405 = vunpack.c.l.b16 %v1660
        %v2406 = vunpack.c.l.b16 %v1661
        %v2407 = vunpack.c.l.b16 %v1662
        %v2408 = vunpack.c.l.b16 %v1663
        %v2409 = vunpack.c.l.b16 %v1664
        %v2410 = vunpack.c.l.b16 %v1665
        %v2411 = vunpack.c.l.b16 %v1666
        %v2412 = vunpack.c.l.b16 %v1667
        %v2413 = vpack.c.b16 %v2398, %v2397
        %v2414 = vpack.c.b16 %v2400, %v2399
        %v2415 = vpack.c.b16 %v2402, %v2401
        %v2416 = vpack.c.b16 %v2404, %v2403
        %v2417 = vpack.c.b16 %v2406, %v2405
        %v2418 = vpack.c.b16 %v2408, %v2407
        %v2419 = vpack.c.b16 %v2410, %v2409
        %v2420 = vpack.c.b16 %v2412, %v2411
        %2429 = vmatpush.bf16.msra.mxu0 %v2420
        %2430 = vmatpush.bf16.msra.mxu0 %v2419
        %2431 = vmatpush.bf16.msra.mxu0 %v2418
        %2432 = vmatpush.bf16.msra.mxu0 %v2417
        %2433 = vmatpush.bf16.msra.mxu0 %v2416
        %2434 = vmatpush.bf16.msra.mxu0 %v2415
        %2435 = vmatpush.bf16.msra.mxu0 %v2414
        %2436 = vmatpush.bf16.msra.mxu0 %v2413
        %2437 = vmatmul.bf16.gmra.mxu0 %v2379
        %v2438 = vpop.f32.mrf.mxu0
        %v2439 = vadd.f32 0.0, %v2438
        %v2440 = vpop.f32.mrf.mxu0
        %v2441 = vadd.f32 0.0, %v2440
        %2442 = vdwg.mxu0
        %v2445 = vunpack.c.l.b16 %v2229
        %v2446 = vunpack.c.l.b16 %v2230
        %v2447 = vpack.c.b16 %v2446, %v2445
        %v2465 = vunpack.c.l.b16 %v1668
        %v2466 = vunpack.c.l.b16 %v1669
        %v2467 = vunpack.c.l.b16 %v1670
        %v2468 = vunpack.c.l.b16 %v1671
        %v2469 = vunpack.c.l.b16 %v1672
        %v2470 = vunpack.c.l.b16 %v1673
        %v2471 = vunpack.c.l.b16 %v1674
        %v2472 = vunpack.c.l.b16 %v1675
        %v2473 = vunpack.c.l.b16 %v1676
        %v2474 = vunpack.c.l.b16 %v1677
        %v2475 = vunpack.c.l.b16 %v1678
        %v2476 = vunpack.c.l.b16 %v1679
        %v2477 = vunpack.c.l.b16 %v1680
        %v2478 = vunpack.c.l.b16 %v1681
        %v2479 = vunpack.c.l.b16 %v1682
        %v2480 = vunpack.c.l.b16 %v1683
        %v2481 = vpack.c.b16 %v2466, %v2465
        %v2482 = vpack.c.b16 %v2468, %v2467
        %v2483 = vpack.c.b16 %v2470, %v2469
        %v2484 = vpack.c.b16 %v2472, %v2471
        %v2485 = vpack.c.b16 %v2474, %v2473
        %v2486 = vpack.c.b16 %v2476, %v2475
        %v2487 = vpack.c.b16 %v2478, %v2477
        %v2488 = vpack.c.b16 %v2480, %v2479
        %2497 = vmatpush.bf16.msra.mxu0 %v2488
        %2498 = vmatpush.bf16.msra.mxu0 %v2487
        %2499 = vmatpush.bf16.msra.mxu0 %v2486
        %2500 = vmatpush.bf16.msra.mxu0 %v2485
        %2501 = vmatpush.bf16.msra.mxu0 %v2484
        %2502 = vmatpush.bf16.msra.mxu0 %v2483
        %2503 = vmatpush.bf16.msra.mxu0 %v2482
        %2504 = vmatpush.bf16.msra.mxu0 %v2481
        %2505 = vmatmul.bf16.gmra.mxu0 %v2447
        %v2506 = vpop.f32.mrf.mxu0
        %v2507 = vadd.f32 0.0, %v2506
        %v2508 = vpop.f32.mrf.mxu0
        %v2509 = vadd.f32 0.0, %v2508
        %2510 = vdwg.mxu0
        %v2511 = vpack.c.bf16 %v2303, %v2303
        %v2512 = vpack.c.bf16 %v2305, %v2305
        %v2513 = vpack.c.bf16 %v2371, %v2371
        %v2514 = vpack.c.bf16 %v2373, %v2373
        %v2515 = vpack.c.bf16 %v2439, %v2439
        %v2516 = vpack.c.bf16 %v2441, %v2441
        %v2517 = vpack.c.bf16 %v2507, %v2507
        %v2518 = vpack.c.bf16 %v2509, %v2509
        %v2521 = vunpack.c.l.b16 %v2511
        %v2522 = vunpack.c.l.b16 %v2512
        %v2523 = vpack.c.b16 %v2522, %v2521
        %v2526 = vunpack.c.l.b16 %v2513
        %v2527 = vunpack.c.l.b16 %v2514
        %v2528 = vpack.c.b16 %v2527, %v2526
        %2529 = vrot.lane.b32.xlu0 %v2528, 8
        %v2530 = vpop.permute.xlu0 %2529
        %v2533 = vunpack.c.l.b16 %v2515
        %v2534 = vunpack.c.l.b16 %v2516
        %v2535 = vpack.c.b16 %v2534, %v2533
        %2536 = vrot.lane.b32.xlu0 %v2535, 16
        %v2537 = vpop.permute.xlu0 %2536
        %v2540 = vunpack.c.l.b16 %v2517
        %v2541 = vunpack.c.l.b16 %v2518
        %v2542 = vpack.c.b16 %v2541, %v2540
        %2543 = vrot.lane.b32.xlu0 %v2542, 24
        %v2544 = vpop.permute.xlu0 %2543
        %v2547 = vsel %vm1731, %v2523, %v2530
        %vm2548 = vcmask 130048
        %v2550 = vsel %vm2548, %v2547, %v2537
        %vm2551 = vcmask 195584
        %v2553 = vsel %vm2551, %v2550, %v2544
        %v2554 = vld [vmem:[%s11] sm:$0xf]
        %v2555 = vld [vmem:[%s11 + $0x4] sm:$0xf]
        %v2556 = vld [vmem:[%s11 + $0x8] sm:$0xf]
        %v2557 = vld [vmem:[%s11 + $0xc] sm:$0xf]
        %v2558 = vld [vmem:[%s12] sm:$0x1]
        %v2560 = vperm.slane %v2558, 0
        %v2566 = vunpack.c.l.b16 %v2554
        %v2567 = vunpack.c.l.b16 %v2555
        %v2568 = vunpack.c.l.b16 %v2556
        %v2569 = vunpack.c.l.b16 %v2557
        %v2570 = vpack.c.b16 %v2567, %v2566
        %v2571 = vpack.c.b16 %v2569, %v2568
        %v2574 = vsel %vm1522, %v2553, 0
        %2576 = vmatpush.bf16.msra.mxu0 0
        %2577 = vmatpush.bf16.msra.mxu0 0
        %2578 = vmatpush.bf16.msra.mxu0 0
        %2579 = vmatpush.bf16.msra.mxu0 0
        %2580 = vmatpush.bf16.msra.mxu0 0
        %2581 = vmatpush.bf16.msra.mxu0 0
        %2582 = vmatpush.bf16.msra.mxu0 %v2571
        %2583 = vmatpush.bf16.msra.mxu0 %v2570
        %2584 = vmatmul.bf16.gmra.mxu0 %v2574
        %v2585 = vpop.f32.mrf.mxu0
        %v2586 = vadd.f32 %v2560, %v2585
        %v2587 = vpop.f32.mrf.mxu0
        %v2588 = vadd.f32 %v2560, %v2587
        %2589 = vdwg.mxu0
        %2590 = vst.msk [vmem:[%s573] sm:$0xff] %vm1522, %v2586
        %2591 = vst.msk [vmem:[%s573 + $0x8] sm:$0xff] %vm1522, %v2588
        %s2592 = sand.u32 %s358, 1
        %s2593 = scalar_lea.sflag [#allocation5], %s2592
        %s2594 = sand.u32 %s358, 1
        %s2595 = smul.addr %s2594, 16
        %s2596 = scalar_lea.vmem [#allocation4], %s2595
        %s2597 = sand.u32 %s386, 1
        %s2598 = scalar_lea.sflag [#allocation7], %s2597
        %s2599 = sand.u32 %s386, 1
        %s2600 = smul.addr %s2599, 32
        %s2601 = scalar_lea.vmem [#allocation6], %s2600
        // Predicated region
        $region77: #{tpu_custom_call.1} parent=71 // pred_check
          %p2602 = pneg %p368
        $region78: #{tpu_custom_call.1} parent=71 // pred_check_branch
          %2604 = sbr.rel (%p2602) target = $region80
        $region79: #{tpu_custom_call.1} parent=71 // pred_region
          %s2605 = smul.u32 2, %s37
          %2607 = vsyncadd %s2593, 0
          %s2608 = smul.addr %s36, 4
          %s2609 = sadd.s32 %s2605, %s2608
          %s2610 = smul.addr %s2609, 8
          %s2611 = scalar_lea.hbm %s13, %s2610
          %s2612 = sshll.u32 %s2596, 4
          %s2613 = int_to_ptr.vmem [resolvable:$true] %s2612
          %s2614 = sshll.u32 %s2611, 4
          %s2615 = int_to_ptr.hbm [resolvable:$true] %s2614
          %2620 = dma.vmem_to_hbm [thread:$0]  %s2613, 256, %s2615, %s2593, 128, 128, 8
        $region80: #{tpu_custom_call.1} parent=71 // pred_fallthru
          _
        // Predicated region
        $region81: #{tpu_custom_call.1} parent=71 // pred_check
          %p2621 = pneg %p396
        $region82: #{tpu_custom_call.1} parent=71 // pred_check_branch
          %2623 = sbr.rel (%p2621) target = $region84
        $region83: #{tpu_custom_call.1} parent=71 // pred_region
          #allocation9 [shape = 'u32[6]{0}', space=smem, size = 0x18, scoped, tag = 'DMA stride descriptor']
          %s2624 = smul.u32 2, %s37
          %2626 = vsyncadd %s2598, 0
          %s2627 = smul.addr %s36, 16
          %s2628 = sadd.s32 %s2624, %s2627
          %s2629 = smul.addr %s2628, 4
          %s2630 = scalar_lea.hbm %s14, %s2629
          %s2632 = sshll.u32 1, 14
          %s2633 = sxor.u32 4294967295, %s2632
          %s2636 = sshll.u32 7, 18
          %s2637 = sxor.u32 4294967295, %s2636
          %s2638 = sand.u32 0, %s2637
          %s2640 = sor.u32 %s2638, 0
          %s2641 = sshll.u32 %s2601, 4
          %s2642 = int_to_ptr.vmem [resolvable:$true] %s2641
          %s2643 = sshll.u32 %s2630, 4
          %s2644 = int_to_ptr.hbm [resolvable:$true] %s2643
          %2650 = sst [smem:[#allocation9]] 128
          %s2651 = scalar_lea.smem [#allocation9], 1
          %2652 = sst [smem:[%s2651]] 256
          %s2653 = scalar_lea.smem [#allocation9], 2
          %2654 = sst [smem:[%s2653]] 2
          %s2655 = scalar_lea.smem [#allocation9], 3
          %2656 = sst [smem:[%s2655]] 64
          %s2657 = scalar_lea.smem [#allocation9], 4
          %2658 = sst [smem:[%s2657]] 64
          %s2659 = scalar_lea.smem [#allocation9], 5
          %2660 = sst [smem:[%s2659]] 4
          %2662 = dma.general %s2642, 512, %s2644, %s2598, [#allocation8], [#allocation9], %s2640, 0
        $region84: #{tpu_custom_call.1} parent=71 // pred_fallthru
          _
      $region72: #{tpu_custom_call.1} parent=5 // pred_fallthru
        _
      %p2663 = scmp.le.s32.totalorder 2, %s27
      // Predicated region
      $region85: #{tpu_custom_call.1} parent=5 // pred_check
        %p2664 = pneg %p2663
      $region86: #{tpu_custom_call.1} parent=5 // pred_check_branch
        %2666 = sbr.rel (%p2664) target = $region88
      $region87: #{tpu_custom_call.1} parent=5 // pred_region
        %s2667 = ssub.s32 %s27, 2
        // Predicated region
        $region89: #{tpu_custom_call.1} parent=87 // pred_check
          %p2668 = pneg %p374
        $region90: #{tpu_custom_call.1} parent=87 // pred_check_branch
          %2670 = sbr.rel (%p2668) target = $region92
        $region91: #{tpu_custom_call.1} parent=87 // pred_region
          %s2671 = sand.u32 %s359, 1
          %s2672 = scalar_lea.sflag [#allocation5], %s2671
          %s2673 = sand.u32 %s359, 1
          %s2674 = smul.addr %s2673, 16
          %s2675 = scalar_lea.vmem [#allocation4], %s2674
          %2677 = dma.done %s2672, 256
        $region92: #{tpu_custom_call.1} parent=87 // pred_fallthru
          _
        // Predicated region
        $region93: #{tpu_custom_call.1} parent=87 // pred_check
          %p2678 = pneg %p402
        $region94: #{tpu_custom_call.1} parent=87 // pred_check_branch
          %2680 = sbr.rel (%p2678) target = $region96
        $region95: #{tpu_custom_call.1} parent=87 // pred_region
          %s2681 = sand.u32 %s387, 1
          %s2682 = scalar_lea.sflag [#allocation7], %s2681
          %s2683 = sand.u32 %s387, 1
          %s2684 = smul.addr %s2683, 32
          %s2685 = scalar_lea.vmem [#allocation6], %s2684
          %2687 = dma.done %s2682, 512
        $region96: #{tpu_custom_call.1} parent=87 // pred_fallthru
          _
      $region88: #{tpu_custom_call.1} parent=5 // pred_fallthru
        _
    $region6: #{tpu_custom_call.1} parent=1 // loop_footer
      %s31 = sadd.s32 1, %s27
    $region7: #{tpu_custom_call.1} parent=1 // loop_footer_branch
      %26 = sbr.rel target = $region3
    $region8: #{tpu_custom_call.1} parent=1 // loop_exit
      _
    %2688 = vsyncpa [#allocation5], 1
    %s2689 = scalar_lea.sflag [#allocation5], 1
    %2690 = vsyncpa %s2689, 1
    %2691 = vsyncpa [#allocation7], 1
    %s2692 = scalar_lea.sflag [#allocation7], 1
    %2693 = vsyncpa %s2692, 1

</llo_original>
